<compile_context>
chip_gen: v7x
topology: tpu7x:2x2x1
jax: 0.10.0
libtpu: 0.0.40
codegen_flags: <defaults>
</compile_context>

<pallas_src>
import jax
import jax.numpy as jnp
from jax.experimental import pallas as pl
from jax.experimental.pallas import tpu as pltpu


# ---------------- model hyper-parameters (small, consistent with the module) ----
B = 2          # batch
N = 8          # sequence length
DIM = 32       # model dim
HEADS = 4      # heads
DIM_HEAD = 16  # per-head dim
INNER = HEADS * DIM_HEAD
SCALE = 8.0    # Attention(..., scale=8) default
LN_EPS = 1e-5
L2_EPS = 1e-12


def attention_kernel(x_ref, gamma_ref, wqkv_ref, qs_ref, ks_ref, wo_ref, o_ref):
    x = x_ref[...]                                   # (b, N, DIM) f32 (b = block batch)
    bblk, n, dim = x.shape
    h, _, dh3 = wqkv_ref.shape
    d = dh3 // 3
    bh = bblk * h

    # ---- LayerNorm (gamma learnable, beta buffer == 0), f32 ----
    mean = jnp.mean(x, axis=-1, keepdims=True)
    var = jnp.mean((x - mean) ** 2, axis=-1, keepdims=True)
    xn = (x - mean) * jax.lax.rsqrt(var + LN_EPS) * gamma_ref[0]

    # ---- broadcast activations over heads / weights over batch (major dims only) ----
    xn_bh = jnp.broadcast_to(xn.astype(jnp.bfloat16)[:, None], (bblk, h, n, dim))
    xn_bh = xn_bh.reshape(bh, n, dim)                                    # (b*h, N, DIM) bf16
    wqkv_bh = jnp.broadcast_to(wqkv_ref[...][None], (bblk, h, dim, dh3))
    wqkv_bh = wqkv_bh.reshape(bh, dim, dh3)                              # (b*h, DIM, 3d) bf16

    # ---- fused Q/K/V projection: ONE batched bf16 matmul, f32 accumulation ----
    qkv = jnp.einsum('bnk,bkd->bnd', xn_bh, wqkv_bh,
                     preferred_element_type=jnp.float32)                 # (b*h, N, 3d) f32
    q = qkv[..., :d]            # static lane slices inside a single 48-lane span
    k = qkv[..., d:2 * d]
    v = qkv[..., 2 * d:]

    # ---- l2 normalize along head dim (F.normalize, eps=1e-12) + learned scales ----
    def l2norm(t):
        ss = jnp.sum(t * t, axis=-1, keepdims=True)
        return t * jax.lax.rsqrt(jnp.maximum(ss, L2_EPS * L2_EPS))

    q = l2norm(q) * qs_ref[0]   # constant attention scale (8.0) already folded in
    k = l2norm(k) * ks_ref[0]

    # ---- batched attention over all (batch, head) pairs at once ----
    # No max-subtraction: q, k are unit-norm, so |sim| <= SCALE*|qs|*|ks| ~ O(10)
    # and exp() stays well inside f32 range.
    sim = jnp.einsum('bid,bjd->bij',
                     q.astype(jnp.bfloat16), k.astype(jnp.bfloat16),
                     preferred_element_type=jnp.float32)                 # (b*h, N, N)
    p = jnp.exp(sim)
    attn = p * pl.reciprocal(jnp.sum(p, axis=-1, keepdims=True), approx=True)
    out = jnp.einsum('bij,bjd->bid',
                     attn.astype(jnp.bfloat16), v.astype(jnp.bfloat16),
                     preferred_element_type=jnp.float32)                 # (b*h, N, d)

    # ---- output projection: per-head Wo row blocks, then reduce over heads ----
    wo_bh = jnp.broadcast_to(wo_ref[...][None], (bblk, h, d, dim)).reshape(bh, d, dim)
    y = jnp.einsum('bnd,bdk->bnk', out.astype(jnp.bfloat16), wo_bh,
                   preferred_element_type=jnp.float32)                   # (b*h, N, DIM)
    o_ref[...] = jnp.sum(y.reshape(bblk, h, n, dim), axis=1)


def attention_forward(x, gamma, wq_t, wkv_t, q_scale, k_scale, wo_t, *,
                      split_batch=False):
    """x: (B, N, DIM) f32.  Linear weights are passed transposed to (in, out).
    split_batch=True adds a 2-way 'parallel' grid over batch (useful on v7x's
    two TensorCores); default single-shot path is best on v5e/v6e."""
    b, n, dim = x.shape
    inner = wq_t.shape[1]
    d = q_scale.shape[-1]
    h = inner // d

    # --- free wrapper-side preprocessing (plain XLA, outside the kernel) ---
    wk_t = wkv_t[:, :inner]
    wv_t = wkv_t[:, inner:]

    def per_head(w):  # (DIM, H*d) -> (H, DIM, d)
        return w.reshape(dim, h, d).transpose(1, 0, 2)

    # Fused per-head QKV weight (H, DIM, 3*d), bf16 (MXU input; f32 accumulate).
    wqkv_h = jnp.concatenate(
        [per_head(wq_t), per_head(wk_t), per_head(wv_t)], axis=-1
    ).astype(jnp.bfloat16)
    # Per-head row blocks of the output projection: (H*d, DIM) -> (H, d, DIM).
    wo_h = wo_t.reshape(h, d, dim).astype(jnp.bfloat16)

    gamma2 = gamma.reshape(1, dim).astype(jnp.float32)
    qs_eff = (q_scale * SCALE).reshape(1, d).astype(jnp.float32)  # fold attention scale
    ks2 = k_scale.reshape(1, d).astype(jnp.float32)

    out_shape = jax.ShapeDtypeStruct((b, n, dim), jnp.float32)

    if not split_batch:
        # Single invocation, no grid: every operand is a whole-array VMEM block.
        return pl.pallas_call(attention_kernel, out_shape=out_shape)(
            x, gamma2, wqkv_h, qs_eff, ks2, wo_h)

    # v7x path: trivial grid over batch so both TensorCores do work.
    return pl.pallas_call(
        attention_kernel,
        out_shape=out_shape,
        grid=(b,),
        in_specs=[
            pl.BlockSpec((1, n, dim), lambda i: (i, 0, 0)),      # x: per-batch slab
            pl.BlockSpec((1, dim), lambda i: (0, 0)),            # gamma (shared)
            pl.BlockSpec((h, dim, 3 * d), lambda i: (0, 0, 0)),  # fused QKV weight
            pl.BlockSpec((1, d), lambda i: (0, 0)),              # q_scale*SCALE
            pl.BlockSpec((1, d), lambda i: (0, 0)),              # k_scale
            pl.BlockSpec((h, d, dim), lambda i: (0, 0, 0)),      # Wo row blocks
        ],
        out_specs=pl.BlockSpec((1, n, dim), lambda i: (i, 0, 0)),
        compiler_params=pltpu.CompilerParams(dimension_semantics=("parallel",)),
    )(x, gamma2, wqkv_h, qs_eff, ks2, wo_h)


def attention_reference(x, gamma, wq_t, wkv_t, q_scale, k_scale, wo_t):
    """Pure-JAX f32 reference mirroring the PyTorch forward."""
    b, n, dim = x.shape
    inner = wq_t.shape[1]
    d = q_scale.shape[-1]
    h = inner // d

    mean = jnp.mean(x, axis=-1, keepdims=True)
    var = jnp.mean((x - mean) ** 2, axis=-1, keepdims=True)
    xn = (x - mean) / jnp.sqrt(var + LN_EPS) * gamma.reshape(dim)

    q = xn @ wq_t
    kv = xn @ wkv_t
    k, v = kv[..., :inner], kv[..., inner:]

    def split_heads(t):  # (B, N, H*d) -> (B, H, N, d)
        return t.reshape(b, n, h, d).transpose(0, 2, 1, 3)

    q, k, v = map(split_heads, (q, k, v))
    l2 = lambda t: t / jnp.maximum(
        jnp.linalg.norm(t, axis=-1, keepdims=True), L2_EPS)
    q = l2(q) * q_scale.reshape(d)
    k = l2(k) * k_scale.reshape(d)

    sim = jnp.einsum('bhid,bhjd->bhij', q, k) * SCALE
    attn = jax.nn.softmax(sim, axis=-1)
    out = jnp.einsum('bhij,bhjd->bhid', attn, v)
    out = out.transpose(0, 2, 1, 3).reshape(b, n, inner)
    return out @ wo_t


if __name__ == "__main__":
    key = jax.random.PRNGKey(0)
    kx, kq, kkv, ko, kg, kqs, kks = jax.random.split(key, 7)

    # deterministic inputs / parameters (scales/gamma perturbed around their init
    # of ones so the gamma / q_scale / k_scale / scale-fold paths are exercised)
    x = jax.random.normal(kx, (B, N, DIM), dtype=jnp.float32)
    gamma = 1.0 + 0.1 * jax.random.normal(kg, (DIM,), jnp.float32)
    q_scale = 1.0 + 0.1 * jax.random.normal(kqs, (DIM_HEAD,), jnp.float32)
    k_scale = 1.0 + 0.1 * jax.random.normal(kks, (DIM_HEAD,), jnp.float32)
    # nn.Linear weights are (out, in) -> pass transposed (in, out)
    wq_t = (jax.random.normal(kq, (INNER, DIM), jnp.float32) / jnp.sqrt(DIM)).T
    wkv_t = (jax.random.normal(kkv, (2 * INNER, DIM), jnp.float32) / jnp.sqrt(DIM)).T
    wo_t = (jax.random.normal(ko, (DIM, INNER), jnp.float32) / jnp.sqrt(INNER)).T

    ref = attention_reference(x, gamma, wq_t, wkv_t, q_scale, k_scale, wo_t)

    # Tolerance covers bf16 MXU inputs (f32 accumulation) and the approximate
    # (EUP) reciprocal in the softmax denominator.
    RTOL = ATOL = 2e-2

    out = jax.block_until_ready(
        attention_forward(x, gamma, wq_t, wkv_t, q_scale, k_scale, wo_t))
    assert out.shape == (B, N, DIM)
    assert jnp.allclose(out, ref, rtol=RTOL, atol=ATOL), "single-shot kernel mismatch"

    out2 = jax.block_until_ready(
        attention_forward(x, gamma, wq_t, wkv_t, q_scale, k_scale, wo_t,
                          split_batch=True))
    assert out2.shape == (B, N, DIM)
    assert jnp.allclose(out2, ref, rtol=RTOL, atol=ATOL), "batch-grid kernel mismatch"

    print("KERNEL_OK")
</pallas_src>

<mosaic_0001>
module attributes {stable_mosaic.version = 11 : i64} {
  func.func @attention_kernel(%arg0: memref<2x8x32xf32, #tpu.memory_space<vmem>>, %arg1: memref<1x32xf32, #tpu.memory_space<vmem>>, %arg2: memref<4x32x48xbf16, #tpu.memory_space<vmem>>, %arg3: memref<1x16xf32, #tpu.memory_space<vmem>>, %arg4: memref<1x16xf32, #tpu.memory_space<vmem>>, %arg5: memref<4x16x32xbf16, #tpu.memory_space<vmem>>, %arg6: memref<2x8x32xf32, #tpu.memory_space<vmem>>) attributes {dimension_semantics = [], scalar_prefetch = 0 : i64, scratch_operands = 0 : i64, tpu.core_type = #tpu.core_type<tc>} {
    %c0 = arith.constant 0 : index
    %c0_0 = arith.constant 0 : index
    %c0_1 = arith.constant 0 : index
    %0 = vector.load %arg0[%c0, %c0_0, %c0_1] : memref<2x8x32xf32, #tpu.memory_space<vmem>>, vector<2x8x32xf32>
    %cst = arith.constant dense<0.000000e+00> : vector<2x8xf32>
    %1 = vector.multi_reduction <add>, %0, %cst [2] : vector<2x8x32xf32> to vector<2x8xf32>
    %2 = vector.shape_cast %1 : vector<2x8xf32> to vector<2x8x1xf32>
    %cst_2 = arith.constant 3.200000e+01 : f32
    %3 = vector.broadcast %cst_2 : f32 to vector<2x8x1xf32>
    %4 = arith.divf %2, %3 : vector<2x8x1xf32>
    %5 = vector.broadcast %4 : vector<2x8x1xf32> to vector<2x8x32xf32>
    %6 = arith.subf %0, %5 : vector<2x8x32xf32>
    %7 = arith.mulf %6, %6 : vector<2x8x32xf32>
    %cst_3 = arith.constant dense<0.000000e+00> : vector<2x8xf32>
    %8 = vector.multi_reduction <add>, %7, %cst_3 [2] : vector<2x8x32xf32> to vector<2x8xf32>
    %9 = vector.shape_cast %8 : vector<2x8xf32> to vector<2x8x1xf32>
    %cst_4 = arith.constant 3.200000e+01 : f32
    %10 = vector.broadcast %cst_4 : f32 to vector<2x8x1xf32>
    %11 = arith.divf %9, %10 : vector<2x8x1xf32>
    %12 = vector.broadcast %4 : vector<2x8x1xf32> to vector<2x8x32xf32>
    %13 = arith.subf %0, %12 : vector<2x8x32xf32>
    %cst_5 = arith.constant 9.99999974E-6 : f32
    %14 = vector.broadcast %cst_5 : f32 to vector<2x8x1xf32>
    %15 = arith.addf %11, %14 : vector<2x8x1xf32>
    %16 = math.rsqrt %15 : vector<2x8x1xf32>
    %17 = vector.broadcast %16 : vector<2x8x1xf32> to vector<2x8x32xf32>
    %18 = arith.mulf %13, %17 : vector<2x8x32xf32>
    %c0_6 = arith.constant 0 : index
    %c0_7 = arith.constant 0 : index
    %19 = vector.load %arg1[%c0_6, %c0_7] : memref<1x32xf32, #tpu.memory_space<vmem>>, vector<1x32xf32>
    %20 = vector.shape_cast %19 : vector<1x32xf32> to vector<32xf32>
    %21 = vector.shape_cast %20 : vector<32xf32> to vector<1x1x32xf32>
    %22 = vector.broadcast %21 : vector<1x1x32xf32> to vector<2x8x32xf32>
    %23 = arith.mulf %18, %22 : vector<2x8x32xf32>
    %24 = arith.truncf %23 : vector<2x8x32xf32> to vector<2x8x32xbf16>
    %25 = vector.shape_cast %24 : vector<2x8x32xbf16> to vector<2x1x8x32xbf16>
    %26 = vector.shape_cast %25 : vector<2x1x8x32xbf16> to vector<2x1x8x32xbf16>
    %27 = vector.broadcast %26 : vector<2x1x8x32xbf16> to vector<2x4x8x32xbf16>
    %28 = vector.shape_cast %27 : vector<2x4x8x32xbf16> to vector<8x8x32xbf16>
    %c0_8 = arith.constant 0 : index
    %c0_9 = arith.constant 0 : index
    %c0_10 = arith.constant 0 : index
    %29 = vector.load %arg2[%c0_8, %c0_9, %c0_10] : memref<4x32x48xbf16, #tpu.memory_space<vmem>>, vector<4x32x48xbf16>
    %30 = vector.shape_cast %29 : vector<4x32x48xbf16> to vector<1x4x32x48xbf16>
    %31 = vector.shape_cast %30 : vector<1x4x32x48xbf16> to vector<1x4x32x48xbf16>
    %32 = vector.broadcast %31 : vector<1x4x32x48xbf16> to vector<2x4x32x48xbf16>
    %33 = vector.shape_cast %32 : vector<2x4x32x48xbf16> to vector<8x32x48xbf16>
    "tpu.trace_start"() <{level = 10 : i32, message = "bnk,bkd->bnd"}> : () -> ()
    %cst_11 = arith.constant dense<0.000000e+00> : vector<8x8x48xf32>
    %34 = tpu.matmul %28, %33, %cst_11 {dimension_numbers = #tpu.dot_dimension_numbers<[2], [1], [1], [2], [0, 0, 0, 1, 1, 2], [0], [0]>} : vector<8x8x32xbf16>, vector<8x32x48xbf16>, vector<8x8x48xf32> -> vector<8x8x48xf32>
    "tpu.trace_stop"() : () -> ()
    %35 = vector.extract_strided_slice %34 {offsets = [0, 0, 0], sizes = [8, 8, 16], strides = [1, 1, 1]} : vector<8x8x48xf32> to vector<8x8x16xf32>
    %36 = vector.extract_strided_slice %34 {offsets = [0, 0, 16], sizes = [8, 8, 16], strides = [1, 1, 1]} : vector<8x8x48xf32> to vector<8x8x16xf32>
    %37 = vector.extract_strided_slice %34 {offsets = [0, 0, 32], sizes = [8, 8, 16], strides = [1, 1, 1]} : vector<8x8x48xf32> to vector<8x8x16xf32>
    %38 = arith.mulf %35, %35 : vector<8x8x16xf32>
    %cst_12 = arith.constant dense<0.000000e+00> : vector<8x8xf32>
    %39 = vector.multi_reduction <add>, %38, %cst_12 [2] : vector<8x8x16xf32> to vector<8x8xf32>
    %40 = vector.shape_cast %39 : vector<8x8xf32> to vector<8x8x1xf32>
    %cst_13 = arith.constant 1.000000e-24 : f32
    %41 = vector.broadcast %cst_13 : f32 to vector<8x8x1xf32>
    %42 = arith.maximumf %40, %41 : vector<8x8x1xf32>
    %43 = math.rsqrt %42 : vector<8x8x1xf32>
    %44 = vector.broadcast %43 : vector<8x8x1xf32> to vector<8x8x16xf32>
    %45 = arith.mulf %35, %44 : vector<8x8x16xf32>
    %c0_14 = arith.constant 0 : index
    %c0_15 = arith.constant 0 : index
    %46 = vector.load %arg3[%c0_14, %c0_15] : memref<1x16xf32, #tpu.memory_space<vmem>>, vector<1x16xf32>
    %47 = vector.shape_cast %46 : vector<1x16xf32> to vector<16xf32>
    %48 = vector.shape_cast %47 : vector<16xf32> to vector<1x1x16xf32>
    %49 = vector.broadcast %48 : vector<1x1x16xf32> to vector<8x8x16xf32>
    %50 = arith.mulf %45, %49 : vector<8x8x16xf32>
    %51 = arith.mulf %36, %36 : vector<8x8x16xf32>
    %cst_16 = arith.constant dense<0.000000e+00> : vector<8x8xf32>
    %52 = vector.multi_reduction <add>, %51, %cst_16 [2] : vector<8x8x16xf32> to vector<8x8xf32>
    %53 = vector.shape_cast %52 : vector<8x8xf32> to vector<8x8x1xf32>
    %cst_17 = arith.constant 1.000000e-24 : f32
    %54 = vector.broadcast %cst_17 : f32 to vector<8x8x1xf32>
    %55 = arith.maximumf %53, %54 : vector<8x8x1xf32>
    %56 = math.rsqrt %55 : vector<8x8x1xf32>
    %57 = vector.broadcast %56 : vector<8x8x1xf32> to vector<8x8x16xf32>
    %58 = arith.mulf %36, %57 : vector<8x8x16xf32>
    %c0_18 = arith.constant 0 : index
    %c0_19 = arith.constant 0 : index
    %59 = vector.load %arg4[%c0_18, %c0_19] : memref<1x16xf32, #tpu.memory_space<vmem>>, vector<1x16xf32>
    %60 = vector.shape_cast %59 : vector<1x16xf32> to vector<16xf32>
    %61 = vector.shape_cast %60 : vector<16xf32> to vector<1x1x16xf32>
    %62 = vector.broadcast %61 : vector<1x1x16xf32> to vector<8x8x16xf32>
    %63 = arith.mulf %58, %62 : vector<8x8x16xf32>
    %64 = arith.truncf %50 : vector<8x8x16xf32> to vector<8x8x16xbf16>
    %65 = arith.truncf %63 : vector<8x8x16xf32> to vector<8x8x16xbf16>
    "tpu.trace_start"() <{level = 10 : i32, message = "bid,bjd->bij"}> : () -> ()
    %cst_20 = arith.constant dense<0.000000e+00> : vector<8x8x8xf32>
    %66 = tpu.matmul %64, %65, %cst_20 {dimension_numbers = #tpu.dot_dimension_numbers<[2], [2], [1], [1], [0, 0, 0, 1, 1, 1], [0], [0]>} : vector<8x8x16xbf16>, vector<8x8x16xbf16>, vector<8x8x8xf32> -> vector<8x8x8xf32>
    "tpu.trace_stop"() : () -> ()
    %67 = math.exp %66 : vector<8x8x8xf32>
    %cst_21 = arith.constant dense<0.000000e+00> : vector<8x8xf32>
    %68 = vector.multi_reduction <add>, %67, %cst_21 [2] : vector<8x8x8xf32> to vector<8x8xf32>
    %69 = vector.shape_cast %68 : vector<8x8xf32> to vector<8x8x1xf32>
    %70 = tpu.reciprocal %69 {approx = true} : vector<8x8x1xf32> -> vector<8x8x1xf32>
    %71 = vector.broadcast %70 : vector<8x8x1xf32> to vector<8x8x8xf32>
    %72 = arith.mulf %67, %71 : vector<8x8x8xf32>
    %73 = arith.truncf %72 : vector<8x8x8xf32> to vector<8x8x8xbf16>
    %74 = arith.truncf %37 : vector<8x8x16xf32> to vector<8x8x16xbf16>
    "tpu.trace_start"() <{level = 10 : i32, message = "bij,bjd->bid"}> : () -> ()
    %cst_22 = arith.constant dense<0.000000e+00> : vector<8x8x16xf32>
    %75 = tpu.matmul %73, %74, %cst_22 {dimension_numbers = #tpu.dot_dimension_numbers<[2], [1], [1], [2], [0, 0, 0, 1, 1, 2], [0], [0]>} : vector<8x8x8xbf16>, vector<8x8x16xbf16>, vector<8x8x16xf32> -> vector<8x8x16xf32>
    "tpu.trace_stop"() : () -> ()
    %c0_23 = arith.constant 0 : index
    %c0_24 = arith.constant 0 : index
    %c0_25 = arith.constant 0 : index
    %76 = vector.load %arg5[%c0_23, %c0_24, %c0_25] : memref<4x16x32xbf16, #tpu.memory_space<vmem>>, vector<4x16x32xbf16>
    %77 = vector.shape_cast %76 : vector<4x16x32xbf16> to vector<1x4x16x32xbf16>
    %78 = vector.shape_cast %77 : vector<1x4x16x32xbf16> to vector<1x4x16x32xbf16>
    %79 = vector.broadcast %78 : vector<1x4x16x32xbf16> to vector<2x4x16x32xbf16>
    %80 = vector.shape_cast %79 : vector<2x4x16x32xbf16> to vector<8x16x32xbf16>
    %81 = arith.truncf %75 : vector<8x8x16xf32> to vector<8x8x16xbf16>
    "tpu.trace_start"() <{level = 10 : i32, message = "bnd,bdk->bnk"}> : () -> ()
    %cst_26 = arith.constant dense<0.000000e+00> : vector<8x8x32xf32>
    %82 = tpu.matmul %81, %80, %cst_26 {dimension_numbers = #tpu.dot_dimension_numbers<[2], [1], [1], [2], [0, 0, 0, 1, 1, 2], [0], [0]>} : vector<8x8x16xbf16>, vector<8x16x32xbf16>, vector<8x8x32xf32> -> vector<8x8x32xf32>
    "tpu.trace_stop"() : () -> ()
    %83 = vector.shape_cast %82 : vector<8x8x32xf32> to vector<2x4x8x32xf32>
    %cst_27 = arith.constant dense<0.000000e+00> : vector<2x8x32xf32>
    %84 = vector.multi_reduction <add>, %83, %cst_27 [1] : vector<2x4x8x32xf32> to vector<2x8x32xf32>
    %c0_28 = arith.constant 0 : index
    %c0_29 = arith.constant 0 : index
    %c0_30 = arith.constant 0 : index
    %85 = vector.load %arg6[%c0_28, %c0_29, %c0_30] : memref<2x8x32xf32, #tpu.memory_space<vmem>>, vector<2x8x32xf32>
    tpu.vector_store %arg6[%c0_28, %c0_29, %c0_30], %84 {strides = array<i32>} : memref<2x8x32xf32, #tpu.memory_space<vmem>>, vector<2x8x32xf32>,
    return
  }
}

</mosaic_0001>

<llo_original>
// kernel: tpu_custom_call.1
$region0: #{tpu_custom_call.1}
  #allocation0 [shape = 'u32[]', space=smem, size = 0x4, offset = 0x4, fixed_abs, tag = 'smem constant byte address 0x4 - core index']
  #allocation1 [shape = 'u32[144,128]{1,0:T(1,128)}', space=vmem, size = 0x12000, scoped, tag = 'internal scratch']
  %s0 = inlined_call_operand.hbm [shape: f32[2,8,32], index: 0, kind: input, shape index: {}]
  %s1 = inlined_call_operand.vmem [shape: f32[1,32], index: 1, kind: input, shape index: {}]
  %s2 = inlined_call_operand.hbm [shape: bf16[4,32,48], index: 2, kind: input, shape index: {}]
  %s3 = inlined_call_operand.vmem [shape: f32[1,16], index: 3, kind: input, shape index: {}]
  %s4 = inlined_call_operand.vmem [shape: f32[1,16], index: 4, kind: input, shape index: {}]
  %s5 = inlined_call_operand.hbm [shape: bf16[4,16,32], index: 5, kind: input, shape index: {}]
  %s6 = inlined_call_operand.hbm [shape: f32[2,8,32], index: 6, kind: output, shape index: {}]
  %s7 = sld [smem:[#allocation0]]
  $region46: #{tpu_custom_call.1} parent=0
    _
  %s9 = ssub.s32 1, %s7
  %s10 = scalar_select 0, %s9, %s7
  $region1: #{tpu_custom_call.1} parent=0
    #allocation2 [shape = 'u8[8192]{0}', space=vmem, size = 0x2000, scoped, tag = 'input window, operand 0, single buffered']
    #allocation3 [shape = 's32[1]{0}', space=sflag, size = 0x4, scoped, tag = 'scoped memory for tpu_custom_call.1']
    #allocation4 [shape = 's32[1]{0}', space=sflag, size = 0x4, scoped, tag = 'scoped memory for tpu_custom_call.1']
    #allocation5 [shape = 'u8[32768]{0}', space=vmem, size = 0x8000, scoped, tag = 'input window, operand 2, single buffered']
    #allocation6 [shape = 's32[1]{0}', space=sflag, size = 0x4, scoped, tag = 'scoped memory for tpu_custom_call.1']
    #allocation7 [shape = 'u8[16384]{0}', space=vmem, size = 0x4000, scoped, tag = 'input window, operand 5, single buffered']
    #allocation8 [shape = 'u8[8192]{0}', space=vmem, size = 0x2000, scoped, tag = 'output window, operand 0, single buffered']
    %11 = vsyncpa [#allocation3], 0
    %12 = vsyncpa [#allocation6], 0
    %13 = vsyncpa [#allocation4], 0
    // Predicated region
    $region2: #{tpu_custom_call.1} parent=1 // pred_check
      _
    $region3: #{tpu_custom_call.1} parent=1 // pred_check_branch
      %15 = sbr.rel (0) target = $region5
    $region4: #{tpu_custom_call.1} parent=1 // pred_region
      %s17 = ssub.s32 256, 256
      %18 = vsyncadd [#allocation3], %s17
      %s19 = sshll.u32 [#allocation2], 4
      %s20 = int_to_ptr.vmem [resolvable:$true] %s19
      %25 = dma.hbm_to_vmem [thread:$0]  %s0, 256, %s20, [#allocation3], 128, 128, 8
    $region5: #{tpu_custom_call.1} parent=1 // pred_fallthru
      _
    // Predicated region
    $region6: #{tpu_custom_call.1} parent=1 // pred_check
      _
    $region7: #{tpu_custom_call.1} parent=1 // pred_check_branch
      %27 = sbr.rel (0) target = $region9
    $region8: #{tpu_custom_call.1} parent=1 // pred_region
      _
    $region9: #{tpu_custom_call.1} parent=1 // pred_fallthru
      _
    // Predicated region
    $region10: #{tpu_custom_call.1} parent=1 // pred_check
      _
    $region11: #{tpu_custom_call.1} parent=1 // pred_check_branch
      %29 = sbr.rel (0) target = $region13
    $region12: #{tpu_custom_call.1} parent=1 // pred_region
      %s31 = ssub.s32 1024, 1024
      %32 = vsyncadd [#allocation6], %s31
      %s33 = sshll.u32 [#allocation5], 4
      %s34 = int_to_ptr.vmem [resolvable:$true] %s33
      %39 = dma.hbm_to_vmem [thread:$0]  %s2, 1024, %s34, [#allocation6], 64, 64, 4
    $region13: #{tpu_custom_call.1} parent=1 // pred_fallthru
      _
    // Predicated region
    $region14: #{tpu_custom_call.1} parent=1 // pred_check
      _
    $region15: #{tpu_custom_call.1} parent=1 // pred_check_branch
      %41 = sbr.rel (0) target = $region17
    $region16: #{tpu_custom_call.1} parent=1 // pred_region
      _
    $region17: #{tpu_custom_call.1} parent=1 // pred_fallthru
      _
    // Predicated region
    $region18: #{tpu_custom_call.1} parent=1 // pred_check
      _
    $region19: #{tpu_custom_call.1} parent=1 // pred_check_branch
      %43 = sbr.rel (0) target = $region21
    $region20: #{tpu_custom_call.1} parent=1 // pred_region
      _
    $region21: #{tpu_custom_call.1} parent=1 // pred_fallthru
      _
    // Predicated region
    $region22: #{tpu_custom_call.1} parent=1 // pred_check
      _
    $region23: #{tpu_custom_call.1} parent=1 // pred_check_branch
      %45 = sbr.rel (0) target = $region25
    $region24: #{tpu_custom_call.1} parent=1 // pred_region
      %s47 = ssub.s32 512, 512
      %48 = vsyncadd [#allocation6], %s47
      %s49 = sshll.u32 [#allocation7], 4
      %s50 = int_to_ptr.vmem [resolvable:$true] %s49
      %55 = dma.hbm_to_vmem [thread:$0]  %s5, 512, %s50, [#allocation6], 64, 64, 4
    $region25: #{tpu_custom_call.1} parent=1 // pred_fallthru
      _
    // Predicated region
    $region26: #{tpu_custom_call.1} parent=1 // pred_check
      _
    $region27: #{tpu_custom_call.1} parent=1 // pred_check_branch
      %57 = sbr.rel (0) target = $region29
    $region28: #{tpu_custom_call.1} parent=1 // pred_region
      %58 = dma.done [#allocation3], 256
    $region29: #{tpu_custom_call.1} parent=1 // pred_fallthru
      _
    // Predicated region
    $region30: #{tpu_custom_call.1} parent=1 // pred_check
      _
    $region31: #{tpu_custom_call.1} parent=1 // pred_check_branch
      %60 = sbr.rel (0) target = $region33
    $region32: #{tpu_custom_call.1} parent=1 // pred_region
      %61 = dma.done [#allocation6], 1024
    $region33: #{tpu_custom_call.1} parent=1 // pred_fallthru
      _
    // Predicated region
    $region34: #{tpu_custom_call.1} parent=1 // pred_check
      _
    $region35: #{tpu_custom_call.1} parent=1 // pred_check_branch
      %63 = sbr.rel (0) target = $region37
    $region36: #{tpu_custom_call.1} parent=1 // pred_region
      %64 = dma.done [#allocation6], 512
    $region37: #{tpu_custom_call.1} parent=1 // pred_fallthru
      _
    %v66 = vld [vmem:[#allocation2] sm:$0xff]
    %v67 = vld [vmem:[#allocation2 + $0x8] sm:$0xff]
    %vm68 = vcmask 261120
    %v69 = vsel %vm68, %v66, 0.0
    %70 = vadd.xlane.f32.xlu0 %v69
    %v71 = vpop.xlane.xlu0 %70
    %v72 = vsel %vm68, %v67, 0.0
    %73 = vadd.xlane.f32.xlu0 %v72
    %v74 = vpop.xlane.xlu0 %73
    %v75 = vrcp.pop 32.0
    %v76 = vmul.f32 %v71, %v75
    %v77 = vmul.f32 %v74, %v75
    %v78 = vsub.f32 %v66, %v76
    %v79 = vsub.f32 %v67, %v77
    %v80 = vmul.f32 %v78, %v78
    %v81 = vmul.f32 %v79, %v79
    %v82 = vsel %vm68, %v80, 0.0
    %83 = vadd.xlane.f32.xlu0 %v82
    %v84 = vpop.xlane.xlu0 %83
    %v85 = vsel %vm68, %v81, 0.0
    %86 = vadd.xlane.f32.xlu0 %v85
    %v87 = vpop.xlane.xlu0 %86
    %v88 = vmul.f32 %v84, %v75
    %v89 = vmul.f32 %v87, %v75
    %v90 = vadd.f32 %v88, 1e-05
    %v91 = vadd.f32 %v89, 1e-05
    %v92 = vrsqrt.pop %v90
    %v93 = vrsqrt.pop %v91
    %v94 = vmul.f32 %v78, %v92
    %v95 = vmul.f32 %v79, %v93
    %v96 = vld [vmem:[%s1] sm:$0x1]
    %v98 = vlaneseq
    %v99 = vshrl.u32 %v98, 7
    %v100 = vsub.s32 0, %v99
    %v101 = vrot.slane %v96, %v100
    %v103 = vmul.f32 %v94, %v101
    %v104 = vmul.f32 %v95, %v101
    %v105 = vpack.c.bf16 %v103, %v103
    %v106 = vpack.c.bf16 %v104, %v104
    %v107 = vld [vmem:[#allocation5] sm:$0xf]
    %v108 = vld [vmem:[#allocation5 + $0x4] sm:$0xf]
    %v109 = vld [vmem:[#allocation5 + $0x8] sm:$0xf]
    %v110 = vld [vmem:[#allocation5 + $0xc] sm:$0xf]
    %v111 = vld [vmem:[#allocation5 + $0x10] sm:$0xf]
    %v112 = vld [vmem:[#allocation5 + $0x14] sm:$0xf]
    %v113 = vld [vmem:[#allocation5 + $0x18] sm:$0xf]
    %v114 = vld [vmem:[#allocation5 + $0x1c] sm:$0xf]
    %v115 = vld [vmem:[#allocation5 + $0x20] sm:$0xf]
    %v116 = vld [vmem:[#allocation5 + $0x24] sm:$0xf]
    %v117 = vld [vmem:[#allocation5 + $0x28] sm:$0xf]
    %v118 = vld [vmem:[#allocation5 + $0x2c] sm:$0xf]
    %v119 = vld [vmem:[#allocation5 + $0x30] sm:$0xf]
    %v120 = vld [vmem:[#allocation5 + $0x34] sm:$0xf]
    %v121 = vld [vmem:[#allocation5 + $0x38] sm:$0xf]
    %v122 = vld [vmem:[#allocation5 + $0x3c] sm:$0xf]
    %v127 = vunpack.c.l.b16 %v107
    %v128 = vunpack.c.l.b16 %v108
    %v129 = vunpack.c.l.b16 %v109
    %v130 = vunpack.c.l.b16 %v110
    %v131 = vpack.c.b16 %v128, %v127
    %v132 = vpack.c.b16 %v130, %v129
    %v136 = vsel %vm68, %v105, 0
    %138 = vmatprep.subr.bf16.mxu0 0
    %139 = vmatpush1.bf16.msra.mxu0 %v131
    %140 = vmatprep.subr.bf16.mxu0 0
    %141 = vmatpush1.bf16.msra.mxu0 %v132
    %142 = vmatprep.subr.bf16.mxu0 0
    %143 = vmatpush1.bf16.msra.mxu0 0
    %144 = vmatprep.subr.bf16.mxu0 0
    %145 = vmatpush1.bf16.msra.mxu0 0
    %146 = vmatprep.subr.bf16.mxu0 0
    %147 = vmatpush1.bf16.msra.mxu0 0
    %148 = vmatprep.subr.bf16.mxu0 0
    %149 = vmatpush1.bf16.msra.mxu0 0
    %150 = vmatprep.subr.bf16.mxu0 0
    %151 = vmatpush1.bf16.msra.mxu0 0
    %152 = vmatprep.subr.bf16.mxu0 0
    %153 = vmatpush1.bf16.msra.mxu0 0
    %154 = vmatprep.subr.bf16.mxu0 0
    %155 = vmatpush1.bf16.msra.mxu0 0
    %156 = vmatprep.subr.bf16.mxu0 0
    %157 = vmatpush1.bf16.msra.mxu0 0
    %158 = vmatprep.subr.bf16.mxu0 0
    %159 = vmatpush1.bf16.msra.mxu0 0
    %160 = vmatprep.subr.bf16.mxu0 0
    %161 = vmatpush1.bf16.msra.mxu0 0
    %162 = vmatprep.subr.bf16.mxu0 0
    %163 = vmatpush1.bf16.msra.mxu0 0
    %164 = vmatprep.subr.bf16.mxu0 0
    %165 = vmatpush1.bf16.msra.mxu0 0
    %166 = vmatprep.subr.bf16.mxu0 0
    %167 = vmatpush1.bf16.msra.mxu0 0
    %168 = vmatprep.subr.bf16.mxu0 0
    %169 = vmatpush1.bf16.msra.mxu0 0
    %170 = vmatprep.mubr.bf16.mxu0 0
    %171 = vmatmul.mubr.bf16.gmra.mrb[0].mxu0 %v136
    %v172 = vpop.f32.mrb[0].mxu0
    %v173 = vadd.f32 0.0, %v172
    %v174 = vpop.f32.mrb[0].mxu0
    %v175 = vpop.f32.mrb[0].mxu0
    %v176 = vpop.f32.mrb[0].mxu0
    %177 = vdwg.mxu0
    %v182 = vunpack.c.l.b16 %v111
    %v183 = vunpack.c.l.b16 %v112
    %v184 = vunpack.c.l.b16 %v113
    %v185 = vunpack.c.l.b16 %v114
    %v186 = vpack.c.b16 %v183, %v182
    %v187 = vpack.c.b16 %v185, %v184
    %190 = vmatprep.subr.bf16.mxu0 0
    %191 = vmatpush1.bf16.msra.mxu0 %v186
    %192 = vmatprep.subr.bf16.mxu0 0
    %193 = vmatpush1.bf16.msra.mxu0 %v187
    %194 = vmatprep.subr.bf16.mxu0 0
    %195 = vmatpush1.bf16.msra.mxu0 0
    %196 = vmatprep.subr.bf16.mxu0 0
    %197 = vmatpush1.bf16.msra.mxu0 0
    %198 = vmatprep.subr.bf16.mxu0 0
    %199 = vmatpush1.bf16.msra.mxu0 0
    %200 = vmatprep.subr.bf16.mxu0 0
    %201 = vmatpush1.bf16.msra.mxu0 0
    %202 = vmatprep.subr.bf16.mxu0 0
    %203 = vmatpush1.bf16.msra.mxu0 0
    %204 = vmatprep.subr.bf16.mxu0 0
    %205 = vmatpush1.bf16.msra.mxu0 0
    %206 = vmatprep.subr.bf16.mxu0 0
    %207 = vmatpush1.bf16.msra.mxu0 0
    %208 = vmatprep.subr.bf16.mxu0 0
    %209 = vmatpush1.bf16.msra.mxu0 0
    %210 = vmatprep.subr.bf16.mxu0 0
    %211 = vmatpush1.bf16.msra.mxu0 0
    %212 = vmatprep.subr.bf16.mxu0 0
    %213 = vmatpush1.bf16.msra.mxu0 0
    %214 = vmatprep.subr.bf16.mxu0 0
    %215 = vmatpush1.bf16.msra.mxu0 0
    %216 = vmatprep.subr.bf16.mxu0 0
    %217 = vmatpush1.bf16.msra.mxu0 0
    %218 = vmatprep.subr.bf16.mxu0 0
    %219 = vmatpush1.bf16.msra.mxu0 0
    %220 = vmatprep.subr.bf16.mxu0 0
    %221 = vmatpush1.bf16.msra.mxu0 0
    %222 = vmatprep.mubr.bf16.mxu0 0
    %223 = vmatmul.mubr.bf16.gmra.mrb[0].mxu0 %v136
    %v224 = vpop.f32.mrb[0].mxu0
    %v225 = vadd.f32 0.0, %v224
    %v226 = vpop.f32.mrb[0].mxu0
    %v227 = vpop.f32.mrb[0].mxu0
    %v228 = vpop.f32.mrb[0].mxu0
    %229 = vdwg.mxu0
    %v234 = vunpack.c.l.b16 %v115
    %v235 = vunpack.c.l.b16 %v116
    %v236 = vunpack.c.l.b16 %v117
    %v237 = vunpack.c.l.b16 %v118
    %v238 = vpack.c.b16 %v235, %v234
    %v239 = vpack.c.b16 %v237, %v236
    %242 = vmatprep.subr.bf16.mxu0 0
    %243 = vmatpush1.bf16.msra.mxu0 %v238
    %244 = vmatprep.subr.bf16.mxu0 0
    %245 = vmatpush1.bf16.msra.mxu0 %v239
    %246 = vmatprep.subr.bf16.mxu0 0
    %247 = vmatpush1.bf16.msra.mxu0 0
    %248 = vmatprep.subr.bf16.mxu0 0
    %249 = vmatpush1.bf16.msra.mxu0 0
    %250 = vmatprep.subr.bf16.mxu0 0
    %251 = vmatpush1.bf16.msra.mxu0 0
    %252 = vmatprep.subr.bf16.mxu0 0
    %253 = vmatpush1.bf16.msra.mxu0 0
    %254 = vmatprep.subr.bf16.mxu0 0
    %255 = vmatpush1.bf16.msra.mxu0 0
    %256 = vmatprep.subr.bf16.mxu0 0
    %257 = vmatpush1.bf16.msra.mxu0 0
    %258 = vmatprep.subr.bf16.mxu0 0
    %259 = vmatpush1.bf16.msra.mxu0 0
    %260 = vmatprep.subr.bf16.mxu0 0
    %261 = vmatpush1.bf16.msra.mxu0 0
    %262 = vmatprep.subr.bf16.mxu0 0
    %263 = vmatpush1.bf16.msra.mxu0 0
    %264 = vmatprep.subr.bf16.mxu0 0
    %265 = vmatpush1.bf16.msra.mxu0 0
    %266 = vmatprep.subr.bf16.mxu0 0
    %267 = vmatpush1.bf16.msra.mxu0 0
    %268 = vmatprep.subr.bf16.mxu0 0
    %269 = vmatpush1.bf16.msra.mxu0 0
    %270 = vmatprep.subr.bf16.mxu0 0
    %271 = vmatpush1.bf16.msra.mxu0 0
    %272 = vmatprep.subr.bf16.mxu0 0
    %273 = vmatpush1.bf16.msra.mxu0 0
    %274 = vmatprep.mubr.bf16.mxu0 0
    %275 = vmatmul.mubr.bf16.gmra.mrb[0].mxu0 %v136
    %v276 = vpop.f32.mrb[0].mxu0
    %v277 = vadd.f32 0.0, %v276
    %v278 = vpop.f32.mrb[0].mxu0
    %v279 = vpop.f32.mrb[0].mxu0
    %v280 = vpop.f32.mrb[0].mxu0
    %281 = vdwg.mxu0
    %v286 = vunpack.c.l.b16 %v119
    %v287 = vunpack.c.l.b16 %v120
    %v288 = vunpack.c.l.b16 %v121
    %v289 = vunpack.c.l.b16 %v122
    %v290 = vpack.c.b16 %v287, %v286
    %v291 = vpack.c.b16 %v289, %v288
    %294 = vmatprep.subr.bf16.mxu0 0
    %295 = vmatpush1.bf16.msra.mxu0 %v290
    %296 = vmatprep.subr.bf16.mxu0 0
    %297 = vmatpush1.bf16.msra.mxu0 %v291
    %298 = vmatprep.subr.bf16.mxu0 0
    %299 = vmatpush1.bf16.msra.mxu0 0
    %300 = vmatprep.subr.bf16.mxu0 0
    %301 = vmatpush1.bf16.msra.mxu0 0
    %302 = vmatprep.subr.bf16.mxu0 0
    %303 = vmatpush1.bf16.msra.mxu0 0
    %304 = vmatprep.subr.bf16.mxu0 0
    %305 = vmatpush1.bf16.msra.mxu0 0
    %306 = vmatprep.subr.bf16.mxu0 0
    %307 = vmatpush1.bf16.msra.mxu0 0
    %308 = vmatprep.subr.bf16.mxu0 0
    %309 = vmatpush1.bf16.msra.mxu0 0
    %310 = vmatprep.subr.bf16.mxu0 0
    %311 = vmatpush1.bf16.msra.mxu0 0
    %312 = vmatprep.subr.bf16.mxu0 0
    %313 = vmatpush1.bf16.msra.mxu0 0
    %314 = vmatprep.subr.bf16.mxu0 0
    %315 = vmatpush1.bf16.msra.mxu0 0
    %316 = vmatprep.subr.bf16.mxu0 0
    %317 = vmatpush1.bf16.msra.mxu0 0
    %318 = vmatprep.subr.bf16.mxu0 0
    %319 = vmatpush1.bf16.msra.mxu0 0
    %320 = vmatprep.subr.bf16.mxu0 0
    %321 = vmatpush1.bf16.msra.mxu0 0
    %322 = vmatprep.subr.bf16.mxu0 0
    %323 = vmatpush1.bf16.msra.mxu0 0
    %324 = vmatprep.subr.bf16.mxu0 0
    %325 = vmatpush1.bf16.msra.mxu0 0
    %326 = vmatprep.mubr.bf16.mxu0 0
    %327 = vmatmul.mubr.bf16.gmra.mrb[0].mxu0 %v136
    %v328 = vpop.f32.mrb[0].mxu0
    %v329 = vadd.f32 0.0, %v328
    %v330 = vpop.f32.mrb[0].mxu0
    %v331 = vpop.f32.mrb[0].mxu0
    %v332 = vpop.f32.mrb[0].mxu0
    %333 = vdwg.mxu0
    %v335 = vsel %vm68, %v106, 0
    %337 = vmatprep.subr.bf16.mxu0 0
    %338 = vmatpush1.bf16.msra.mxu0 %v131
    %339 = vmatprep.subr.bf16.mxu0 0
    %340 = vmatpush1.bf16.msra.mxu0 %v132
    %341 = vmatprep.subr.bf16.mxu0 0
    %342 = vmatpush1.bf16.msra.mxu0 0
    %343 = vmatprep.subr.bf16.mxu0 0
    %344 = vmatpush1.bf16.msra.mxu0 0
    %345 = vmatprep.subr.bf16.mxu0 0
    %346 = vmatpush1.bf16.msra.mxu0 0
    %347 = vmatprep.subr.bf16.mxu0 0
    %348 = vmatpush1.bf16.msra.mxu0 0
    %349 = vmatprep.subr.bf16.mxu0 0
    %350 = vmatpush1.bf16.msra.mxu0 0
    %351 = vmatprep.subr.bf16.mxu0 0
    %352 = vmatpush1.bf16.msra.mxu0 0
    %353 = vmatprep.subr.bf16.mxu0 0
    %354 = vmatpush1.bf16.msra.mxu0 0
    %355 = vmatprep.subr.bf16.mxu0 0
    %356 = vmatpush1.bf16.msra.mxu0 0
    %357 = vmatprep.subr.bf16.mxu0 0
    %358 = vmatpush1.bf16.msra.mxu0 0
    %359 = vmatprep.subr.bf16.mxu0 0
    %360 = vmatpush1.bf16.msra.mxu0 0
    %361 = vmatprep.subr.bf16.mxu0 0
    %362 = vmatpush1.bf16.msra.mxu0 0
    %363 = vmatprep.subr.bf16.mxu0 0
    %364 = vmatpush1.bf16.msra.mxu0 0
    %365 = vmatprep.subr.bf16.mxu0 0
    %366 = vmatpush1.bf16.msra.mxu0 0
    %367 = vmatprep.subr.bf16.mxu0 0
    %368 = vmatpush1.bf16.msra.mxu0 0
    %369 = vmatprep.mubr.bf16.mxu0 0
    %370 = vmatmul.mubr.bf16.gmra.mrb[0].mxu0 %v335
    %v371 = vpop.f32.mrb[0].mxu0
    %v372 = vadd.f32 0.0, %v371
    %v373 = vpop.f32.mrb[0].mxu0
    %v374 = vpop.f32.mrb[0].mxu0
    %v375 = vpop.f32.mrb[0].mxu0
    %376 = vdwg.mxu0
    %377 = vmatprep.subr.bf16.mxu0 0
    %378 = vmatpush1.bf16.msra.mxu0 %v186
    %379 = vmatprep.subr.bf16.mxu0 0
    %380 = vmatpush1.bf16.msra.mxu0 %v187
    %381 = vmatprep.subr.bf16.mxu0 0
    %382 = vmatpush1.bf16.msra.mxu0 0
    %383 = vmatprep.subr.bf16.mxu0 0
    %384 = vmatpush1.bf16.msra.mxu0 0
    %385 = vmatprep.subr.bf16.mxu0 0
    %386 = vmatpush1.bf16.msra.mxu0 0
    %387 = vmatprep.subr.bf16.mxu0 0
    %388 = vmatpush1.bf16.msra.mxu0 0
    %389 = vmatprep.subr.bf16.mxu0 0
    %390 = vmatpush1.bf16.msra.mxu0 0
    %391 = vmatprep.subr.bf16.mxu0 0
    %392 = vmatpush1.bf16.msra.mxu0 0
    %393 = vmatprep.subr.bf16.mxu0 0
    %394 = vmatpush1.bf16.msra.mxu0 0
    %395 = vmatprep.subr.bf16.mxu0 0
    %396 = vmatpush1.bf16.msra.mxu0 0
    %397 = vmatprep.subr.bf16.mxu0 0
    %398 = vmatpush1.bf16.msra.mxu0 0
    %399 = vmatprep.subr.bf16.mxu0 0
    %400 = vmatpush1.bf16.msra.mxu0 0
    %401 = vmatprep.subr.bf16.mxu0 0
    %402 = vmatpush1.bf16.msra.mxu0 0
    %403 = vmatprep.subr.bf16.mxu0 0
    %404 = vmatpush1.bf16.msra.mxu0 0
    %405 = vmatprep.subr.bf16.mxu0 0
    %406 = vmatpush1.bf16.msra.mxu0 0
    %407 = vmatprep.subr.bf16.mxu0 0
    %408 = vmatpush1.bf16.msra.mxu0 0
    %409 = vmatprep.mubr.bf16.mxu0 0
    %410 = vmatmul.mubr.bf16.gmra.mrb[0].mxu0 %v335
    %v411 = vpop.f32.mrb[0].mxu0
    %v412 = vadd.f32 0.0, %v411
    %v413 = vpop.f32.mrb[0].mxu0
    %v414 = vpop.f32.mrb[0].mxu0
    %v415 = vpop.f32.mrb[0].mxu0
    %416 = vdwg.mxu0
    %417 = vmatprep.subr.bf16.mxu0 0
    %418 = vmatpush1.bf16.msra.mxu0 %v238
    %419 = vmatprep.subr.bf16.mxu0 0
    %420 = vmatpush1.bf16.msra.mxu0 %v239
    %421 = vmatprep.subr.bf16.mxu0 0
    %422 = vmatpush1.bf16.msra.mxu0 0
    %423 = vmatprep.subr.bf16.mxu0 0
    %424 = vmatpush1.bf16.msra.mxu0 0
    %425 = vmatprep.subr.bf16.mxu0 0
    %426 = vmatpush1.bf16.msra.mxu0 0
    %427 = vmatprep.subr.bf16.mxu0 0
    %428 = vmatpush1.bf16.msra.mxu0 0
    %429 = vmatprep.subr.bf16.mxu0 0
    %430 = vmatpush1.bf16.msra.mxu0 0
    %431 = vmatprep.subr.bf16.mxu0 0
    %432 = vmatpush1.bf16.msra.mxu0 0
    %433 = vmatprep.subr.bf16.mxu0 0
    %434 = vmatpush1.bf16.msra.mxu0 0
    %435 = vmatprep.subr.bf16.mxu0 0
    %436 = vmatpush1.bf16.msra.mxu0 0
    %437 = vmatprep.subr.bf16.mxu0 0
    %438 = vmatpush1.bf16.msra.mxu0 0
    %439 = vmatprep.subr.bf16.mxu0 0
    %440 = vmatpush1.bf16.msra.mxu0 0
    %441 = vmatprep.subr.bf16.mxu0 0
    %442 = vmatpush1.bf16.msra.mxu0 0
    %443 = vmatprep.subr.bf16.mxu0 0
    %444 = vmatpush1.bf16.msra.mxu0 0
    %445 = vmatprep.subr.bf16.mxu0 0
    %446 = vmatpush1.bf16.msra.mxu0 0
    %447 = vmatprep.subr.bf16.mxu0 0
    %448 = vmatpush1.bf16.msra.mxu0 0
    %449 = vmatprep.mubr.bf16.mxu0 0
    %450 = vmatmul.mubr.bf16.gmra.mrb[0].mxu0 %v335
    %v451 = vpop.f32.mrb[0].mxu0
    %v452 = vadd.f32 0.0, %v451
    %v453 = vpop.f32.mrb[0].mxu0
    %v454 = vpop.f32.mrb[0].mxu0
    %v455 = vpop.f32.mrb[0].mxu0
    %456 = vdwg.mxu0
    %457 = vmatprep.subr.bf16.mxu0 0
    %458 = vmatpush1.bf16.msra.mxu0 %v290
    %459 = vmatprep.subr.bf16.mxu0 0
    %460 = vmatpush1.bf16.msra.mxu0 %v291
    %461 = vmatprep.subr.bf16.mxu0 0
    %462 = vmatpush1.bf16.msra.mxu0 0
    %463 = vmatprep.subr.bf16.mxu0 0
    %464 = vmatpush1.bf16.msra.mxu0 0
    %465 = vmatprep.subr.bf16.mxu0 0
    %466 = vmatpush1.bf16.msra.mxu0 0
    %467 = vmatprep.subr.bf16.mxu0 0
    %468 = vmatpush1.bf16.msra.mxu0 0
    %469 = vmatprep.subr.bf16.mxu0 0
    %470 = vmatpush1.bf16.msra.mxu0 0
    %471 = vmatprep.subr.bf16.mxu0 0
    %472 = vmatpush1.bf16.msra.mxu0 0
    %473 = vmatprep.subr.bf16.mxu0 0
    %474 = vmatpush1.bf16.msra.mxu0 0
    %475 = vmatprep.subr.bf16.mxu0 0
    %476 = vmatpush1.bf16.msra.mxu0 0
    %477 = vmatprep.subr.bf16.mxu0 0
    %478 = vmatpush1.bf16.msra.mxu0 0
    %479 = vmatprep.subr.bf16.mxu0 0
    %480 = vmatpush1.bf16.msra.mxu0 0
    %481 = vmatprep.subr.bf16.mxu0 0
    %482 = vmatpush1.bf16.msra.mxu0 0
    %483 = vmatprep.subr.bf16.mxu0 0
    %484 = vmatpush1.bf16.msra.mxu0 0
    %485 = vmatprep.subr.bf16.mxu0 0
    %486 = vmatpush1.bf16.msra.mxu0 0
    %487 = vmatprep.subr.bf16.mxu0 0
    %488 = vmatpush1.bf16.msra.mxu0 0
    %489 = vmatprep.mubr.bf16.mxu0 0
    %490 = vmatmul.mubr.bf16.gmra.mrb[0].mxu0 %v335
    %v491 = vpop.f32.mrb[0].mxu0
    %v492 = vadd.f32 0.0, %v491
    %v493 = vpop.f32.mrb[0].mxu0
    %v494 = vpop.f32.mrb[0].mxu0
    %v495 = vpop.f32.mrb[0].mxu0
    %496 = vdwg.mxu0
    %v497 = vmul.f32 %v173, %v173
    %v498 = vmul.f32 %v225, %v225
    %v499 = vmul.f32 %v277, %v277
    %v500 = vmul.f32 %v329, %v329
    %v501 = vmul.f32 %v372, %v372
    %v502 = vmul.f32 %v412, %v412
    %v503 = vmul.f32 %v452, %v452
    %v504 = vmul.f32 %v492, %v492
    %vm505 = vcmask 130048
    %v506 = vsel %vm505, %v497, 0.0
    %507 = vadd.xlane.f32.xlu0 %v506
    %v508 = vpop.xlane.xlu0 %507
    %v509 = vsel %vm505, %v498, 0.0
    %510 = vadd.xlane.f32.xlu0 %v509
    %v511 = vpop.xlane.xlu0 %510
    %v512 = vsel %vm505, %v499, 0.0
    %513 = vadd.xlane.f32.xlu0 %v512
    %v514 = vpop.xlane.xlu0 %513
    %v515 = vsel %vm505, %v500, 0.0
    %516 = vadd.xlane.f32.xlu0 %v515
    %v517 = vpop.xlane.xlu0 %516
    %v518 = vsel %vm505, %v501, 0.0
    %519 = vadd.xlane.f32.xlu0 %v518
    %v520 = vpop.xlane.xlu0 %519
    %v521 = vsel %vm505, %v502, 0.0
    %522 = vadd.xlane.f32.xlu0 %v521
    %v523 = vpop.xlane.xlu0 %522
    %v524 = vsel %vm505, %v503, 0.0
    %525 = vadd.xlane.f32.xlu0 %v524
    %v526 = vpop.xlane.xlu0 %525
    %v527 = vsel %vm505, %v504, 0.0
    %528 = vadd.xlane.f32.xlu0 %v527
    %v529 = vpop.xlane.xlu0 %528
    %v530 = vmax.f32 %v508, 1e-24
    %v531 = vmax.f32 %v511, 1e-24
    %v532 = vmax.f32 %v514, 1e-24
    %v533 = vmax.f32 %v517, 1e-24
    %v534 = vmax.f32 %v520, 1e-24
    %v535 = vmax.f32 %v523, 1e-24
    %v536 = vmax.f32 %v526, 1e-24
    %v537 = vmax.f32 %v529, 1e-24
    %v538 = vrsqrt.pop %v530
    %v539 = vrsqrt.pop %v531
    %v540 = vrsqrt.pop %v532
    %v541 = vrsqrt.pop %v533
    %v542 = vrsqrt.pop %v534
    %v543 = vrsqrt.pop %v535
    %v544 = vrsqrt.pop %v536
    %v545 = vrsqrt.pop %v537
    %v546 = vmul.f32 %v173, %v538
    %v547 = vmul.f32 %v225, %v539
    %v548 = vmul.f32 %v277, %v540
    %v549 = vmul.f32 %v329, %v541
    %v550 = vmul.f32 %v372, %v542
    %v551 = vmul.f32 %v412, %v543
    %v552 = vmul.f32 %v452, %v544
    %v553 = vmul.f32 %v492, %v545
    %v554 = vld [vmem:[%s3] sm:$0x1]
    %v556 = vlaneseq
    %v557 = vshrl.u32 %v556, 7
    %v558 = vsub.s32 0, %v557
    %v559 = vrot.slane %v554, %v558
    %v561 = vmul.f32 %v546, %v559
    %v562 = vmul.f32 %v547, %v559
    %v563 = vmul.f32 %v548, %v559
    %v564 = vmul.f32 %v549, %v559
    %v565 = vmul.f32 %v550, %v559
    %v566 = vmul.f32 %v551, %v559
    %v567 = vmul.f32 %v552, %v559
    %v568 = vmul.f32 %v553, %v559
    %577 = vrot.lane.b32.xlu0 %v497, 112
    %v578 = vpop.permute.xlu0 %577
    %579 = vrot.lane.b32.xlu0 %v498, 112
    %v580 = vpop.permute.xlu0 %579
    %581 = vrot.lane.b32.xlu0 %v499, 112
    %v582 = vpop.permute.xlu0 %581
    %583 = vrot.lane.b32.xlu0 %v500, 112
    %v584 = vpop.permute.xlu0 %583
    %585 = vrot.lane.b32.xlu0 %v501, 112
    %v586 = vpop.permute.xlu0 %585
    %587 = vrot.lane.b32.xlu0 %v502, 112
    %v588 = vpop.permute.xlu0 %587
    %589 = vrot.lane.b32.xlu0 %v503, 112
    %v590 = vpop.permute.xlu0 %589
    %591 = vrot.lane.b32.xlu0 %v504, 112
    %v592 = vpop.permute.xlu0 %591
    %v601 = vsel %vm505, %v578, 0.0
    %602 = vadd.xlane.f32.xlu0 %v601
    %v603 = vpop.xlane.xlu0 %602
    %v604 = vsel %vm505, %v580, 0.0
    %605 = vadd.xlane.f32.xlu0 %v604
    %v606 = vpop.xlane.xlu0 %605
    %v607 = vsel %vm505, %v582, 0.0
    %608 = vadd.xlane.f32.xlu0 %v607
    %v609 = vpop.xlane.xlu0 %608
    %v610 = vsel %vm505, %v584, 0.0
    %611 = vadd.xlane.f32.xlu0 %v610
    %v612 = vpop.xlane.xlu0 %611
    %v613 = vsel %vm505, %v586, 0.0
    %614 = vadd.xlane.f32.xlu0 %v613
    %v615 = vpop.xlane.xlu0 %614
    %v616 = vsel %vm505, %v588, 0.0
    %617 = vadd.xlane.f32.xlu0 %v616
    %v618 = vpop.xlane.xlu0 %617
    %v619 = vsel %vm505, %v590, 0.0
    %620 = vadd.xlane.f32.xlu0 %v619
    %v621 = vpop.xlane.xlu0 %620
    %v622 = vsel %vm505, %v592, 0.0
    %623 = vadd.xlane.f32.xlu0 %v622
    %v624 = vpop.xlane.xlu0 %623
    %v625 = vmax.f32 %v603, 1e-24
    %v626 = vmax.f32 %v606, 1e-24
    %v627 = vmax.f32 %v609, 1e-24
    %v628 = vmax.f32 %v612, 1e-24
    %v629 = vmax.f32 %v615, 1e-24
    %v630 = vmax.f32 %v618, 1e-24
    %v631 = vmax.f32 %v621, 1e-24
    %v632 = vmax.f32 %v624, 1e-24
    %v633 = vrsqrt.pop %v625
    %v634 = vrsqrt.pop %v626
    %v635 = vrsqrt.pop %v627
    %v636 = vrsqrt.pop %v628
    %v637 = vrsqrt.pop %v629
    %v638 = vrsqrt.pop %v630
    %v639 = vrsqrt.pop %v631
    %v640 = vrsqrt.pop %v632
    %v641 = vmul.f32 %v173, %v633
    %v642 = vmul.f32 %v225, %v634
    %v643 = vmul.f32 %v277, %v635
    %v644 = vmul.f32 %v329, %v636
    %v645 = vmul.f32 %v372, %v637
    %v646 = vmul.f32 %v412, %v638
    %v647 = vmul.f32 %v452, %v639
    %v648 = vmul.f32 %v492, %v640
    %v649 = vld [vmem:[%s4] sm:$0x1]
    %v651 = vlaneseq
    %v652 = vshrl.u32 %v651, 7
    %v653 = vsub.s32 0, %v652
    %v654 = vrot.slane %v649, %v653
    %655 = vrot.lane.b32.xlu0 %v654, 16
    %v656 = vpop.permute.xlu0 %655
    %v658 = vmul.f32 %v641, %v656
    %v659 = vmul.f32 %v642, %v656
    %v660 = vmul.f32 %v643, %v656
    %v661 = vmul.f32 %v644, %v656
    %v662 = vmul.f32 %v645, %v656
    %v663 = vmul.f32 %v646, %v656
    %v664 = vmul.f32 %v647, %v656
    %v665 = vmul.f32 %v648, %v656
    %v666 = vpack.c.bf16 %v561, %v561
    %v667 = vpack.c.bf16 %v562, %v562
    %v668 = vpack.c.bf16 %v563, %v563
    %v669 = vpack.c.bf16 %v564, %v564
    %v670 = vpack.c.bf16 %v565, %v565
    %v671 = vpack.c.bf16 %v566, %v566
    %v672 = vpack.c.bf16 %v567, %v567
    %v673 = vpack.c.bf16 %v568, %v568
    %v674 = vpack.c.bf16 %v658, %v658
    %v675 = vpack.c.bf16 %v659, %v659
    %v676 = vpack.c.bf16 %v660, %v660
    %v677 = vpack.c.bf16 %v661, %v661
    %v678 = vpack.c.bf16 %v662, %v662
    %v679 = vpack.c.bf16 %v663, %v663
    %v680 = vpack.c.bf16 %v664, %v664
    %v681 = vpack.c.bf16 %v665, %v665
    %683 = vrot.lane.b32.xlu0 %v674, 112
    %v684 = vpop.permute.xlu0 %683
    %v686 = vsel %vm505, %v666, 0
    %v689 = vsel %vm505, %v684, 0
    %691 = vmatprep.subr.bf16.mxu0 0
    %692 = vmatpush1.bf16.xpose.msra.mxu0 %v689
    %693 = vmatprep.subr.bf16.mxu0 0
    %694 = vmatpush1.bf16.xpose.msra.mxu0 0
    %695 = vmatprep.subr.bf16.mxu0 0
    %696 = vmatpush1.bf16.xpose.msra.mxu0 0
    %697 = vmatprep.subr.bf16.mxu0 0
    %698 = vmatpush1.bf16.xpose.msra.mxu0 0
    %699 = vmatprep.subr.bf16.mxu0 0
    %700 = vmatpush1.bf16.xpose.msra.mxu0 0
    %701 = vmatprep.subr.bf16.mxu0 0
    %702 = vmatpush1.bf16.xpose.msra.mxu0 0
    %703 = vmatprep.subr.bf16.mxu0 0
    %704 = vmatpush1.bf16.xpose.msra.mxu0 0
    %705 = vmatprep.subr.bf16.mxu0 0
    %706 = vmatpush1.bf16.xpose.msra.mxu0 0
    %707 = vmatprep.subr.bf16.mxu0 0
    %708 = vmatpush1.bf16.xpose.msra.mxu0 0
    %709 = vmatprep.subr.bf16.mxu0 0
    %710 = vmatpush1.bf16.xpose.msra.mxu0 0
    %711 = vmatprep.subr.bf16.mxu0 0
    %712 = vmatpush1.bf16.xpose.msra.mxu0 0
    %713 = vmatprep.subr.bf16.mxu0 0
    %714 = vmatpush1.bf16.xpose.msra.mxu0 0
    %715 = vmatprep.subr.bf16.mxu0 0
    %716 = vmatpush1.bf16.xpose.msra.mxu0 0
    %717 = vmatprep.subr.bf16.mxu0 0
    %718 = vmatpush1.bf16.xpose.msra.mxu0 0
    %719 = vmatprep.subr.bf16.mxu0 0
    %720 = vmatpush1.bf16.xpose.msra.mxu0 0
    %721 = vmatprep.subr.bf16.mxu0 0
    %722 = vmatpush1.bf16.xpose.msra.mxu0 0
    %723 = vmatprep.mubr.bf16.mxu0 0
    %724 = vmatmul.mubr.bf16.gmra.mrb[0].mxu0 %v686
    %v725 = vpop.f32.mrb[0].mxu0
    %v726 = vadd.f32 0.0, %v725
    %v727 = vpop.f32.mrb[0].mxu0
    %v728 = vpop.f32.mrb[0].mxu0
    %v729 = vpop.f32.mrb[0].mxu0
    %730 = vdwg.mxu0
    %732 = vrot.lane.b32.xlu0 %v675, 112
    %v733 = vpop.permute.xlu0 %732
    %v735 = vsel %vm505, %v667, 0
    %v738 = vsel %vm505, %v733, 0
    %740 = vmatprep.subr.bf16.mxu0 0
    %741 = vmatpush1.bf16.xpose.msra.mxu0 %v738
    %742 = vmatprep.subr.bf16.mxu0 0
    %743 = vmatpush1.bf16.xpose.msra.mxu0 0
    %744 = vmatprep.subr.bf16.mxu0 0
    %745 = vmatpush1.bf16.xpose.msra.mxu0 0
    %746 = vmatprep.subr.bf16.mxu0 0
    %747 = vmatpush1.bf16.xpose.msra.mxu0 0
    %748 = vmatprep.subr.bf16.mxu0 0
    %749 = vmatpush1.bf16.xpose.msra.mxu0 0
    %750 = vmatprep.subr.bf16.mxu0 0
    %751 = vmatpush1.bf16.xpose.msra.mxu0 0
    %752 = vmatprep.subr.bf16.mxu0 0
    %753 = vmatpush1.bf16.xpose.msra.mxu0 0
    %754 = vmatprep.subr.bf16.mxu0 0
    %755 = vmatpush1.bf16.xpose.msra.mxu0 0
    %756 = vmatprep.subr.bf16.mxu0 0
    %757 = vmatpush1.bf16.xpose.msra.mxu0 0
    %758 = vmatprep.subr.bf16.mxu0 0
    %759 = vmatpush1.bf16.xpose.msra.mxu0 0
    %760 = vmatprep.subr.bf16.mxu0 0
    %761 = vmatpush1.bf16.xpose.msra.mxu0 0
    %762 = vmatprep.subr.bf16.mxu0 0
    %763 = vmatpush1.bf16.xpose.msra.mxu0 0
    %764 = vmatprep.subr.bf16.mxu0 0
    %765 = vmatpush1.bf16.xpose.msra.mxu0 0
    %766 = vmatprep.subr.bf16.mxu0 0
    %767 = vmatpush1.bf16.xpose.msra.mxu0 0
    %768 = vmatprep.subr.bf16.mxu0 0
    %769 = vmatpush1.bf16.xpose.msra.mxu0 0
    %770 = vmatprep.subr.bf16.mxu0 0
    %771 = vmatpush1.bf16.xpose.msra.mxu0 0
    %772 = vmatprep.mubr.bf16.mxu0 0
    %773 = vmatmul.mubr.bf16.gmra.mrb[0].mxu0 %v735
    %v774 = vpop.f32.mrb[0].mxu0
    %v775 = vadd.f32 0.0, %v774
    %v776 = vpop.f32.mrb[0].mxu0
    %v777 = vpop.f32.mrb[0].mxu0
    %v778 = vpop.f32.mrb[0].mxu0
    %779 = vdwg.mxu0
    %781 = vrot.lane.b32.xlu0 %v676, 112
    %v782 = vpop.permute.xlu0 %781
    %v784 = vsel %vm505, %v668, 0
    %v787 = vsel %vm505, %v782, 0
    %789 = vmatprep.subr.bf16.mxu0 0
    %790 = vmatpush1.bf16.xpose.msra.mxu0 %v787
    %791 = vmatprep.subr.bf16.mxu0 0
    %792 = vmatpush1.bf16.xpose.msra.mxu0 0
    %793 = vmatprep.subr.bf16.mxu0 0
    %794 = vmatpush1.bf16.xpose.msra.mxu0 0
    %795 = vmatprep.subr.bf16.mxu0 0
    %796 = vmatpush1.bf16.xpose.msra.mxu0 0
    %797 = vmatprep.subr.bf16.mxu0 0
    %798 = vmatpush1.bf16.xpose.msra.mxu0 0
    %799 = vmatprep.subr.bf16.mxu0 0
    %800 = vmatpush1.bf16.xpose.msra.mxu0 0
    %801 = vmatprep.subr.bf16.mxu0 0
    %802 = vmatpush1.bf16.xpose.msra.mxu0 0
    %803 = vmatprep.subr.bf16.mxu0 0
    %804 = vmatpush1.bf16.xpose.msra.mxu0 0
    %805 = vmatprep.subr.bf16.mxu0 0
    %806 = vmatpush1.bf16.xpose.msra.mxu0 0
    %807 = vmatprep.subr.bf16.mxu0 0
    %808 = vmatpush1.bf16.xpose.msra.mxu0 0
    %809 = vmatprep.subr.bf16.mxu0 0
    %810 = vmatpush1.bf16.xpose.msra.mxu0 0
    %811 = vmatprep.subr.bf16.mxu0 0
    %812 = vmatpush1.bf16.xpose.msra.mxu0 0
    %813 = vmatprep.subr.bf16.mxu0 0
    %814 = vmatpush1.bf16.xpose.msra.mxu0 0
    %815 = vmatprep.subr.bf16.mxu0 0
    %816 = vmatpush1.bf16.xpose.msra.mxu0 0
    %817 = vmatprep.subr.bf16.mxu0 0
    %818 = vmatpush1.bf16.xpose.msra.mxu0 0
    %819 = vmatprep.subr.bf16.mxu0 0
    %820 = vmatpush1.bf16.xpose.msra.mxu0 0
    %821 = vmatprep.mubr.bf16.mxu0 0
    %822 = vmatmul.mubr.bf16.gmra.mrb[0].mxu0 %v784
    %v823 = vpop.f32.mrb[0].mxu0
    %v824 = vadd.f32 0.0, %v823
    %v825 = vpop.f32.mrb[0].mxu0
    %v826 = vpop.f32.mrb[0].mxu0
    %v827 = vpop.f32.mrb[0].mxu0
    %828 = vdwg.mxu0
    %830 = vrot.lane.b32.xlu0 %v677, 112
    %v831 = vpop.permute.xlu0 %830
    %v833 = vsel %vm505, %v669, 0
    %v836 = vsel %vm505, %v831, 0
    %838 = vmatprep.subr.bf16.mxu0 0
    %839 = vmatpush1.bf16.xpose.msra.mxu0 %v836
    %840 = vmatprep.subr.bf16.mxu0 0
    %841 = vmatpush1.bf16.xpose.msra.mxu0 0
    %842 = vmatprep.subr.bf16.mxu0 0
    %843 = vmatpush1.bf16.xpose.msra.mxu0 0
    %844 = vmatprep.subr.bf16.mxu0 0
    %845 = vmatpush1.bf16.xpose.msra.mxu0 0
    %846 = vmatprep.subr.bf16.mxu0 0
    %847 = vmatpush1.bf16.xpose.msra.mxu0 0
    %848 = vmatprep.subr.bf16.mxu0 0
    %849 = vmatpush1.bf16.xpose.msra.mxu0 0
    %850 = vmatprep.subr.bf16.mxu0 0
    %851 = vmatpush1.bf16.xpose.msra.mxu0 0
    %852 = vmatprep.subr.bf16.mxu0 0
    %853 = vmatpush1.bf16.xpose.msra.mxu0 0
    %854 = vmatprep.subr.bf16.mxu0 0
    %855 = vmatpush1.bf16.xpose.msra.mxu0 0
    %856 = vmatprep.subr.bf16.mxu0 0
    %857 = vmatpush1.bf16.xpose.msra.mxu0 0
    %858 = vmatprep.subr.bf16.mxu0 0
    %859 = vmatpush1.bf16.xpose.msra.mxu0 0
    %860 = vmatprep.subr.bf16.mxu0 0
    %861 = vmatpush1.bf16.xpose.msra.mxu0 0
    %862 = vmatprep.subr.bf16.mxu0 0
    %863 = vmatpush1.bf16.xpose.msra.mxu0 0
    %864 = vmatprep.subr.bf16.mxu0 0
    %865 = vmatpush1.bf16.xpose.msra.mxu0 0
    %866 = vmatprep.subr.bf16.mxu0 0
    %867 = vmatpush1.bf16.xpose.msra.mxu0 0
    %868 = vmatprep.subr.bf16.mxu0 0
    %869 = vmatpush1.bf16.xpose.msra.mxu0 0
    %870 = vmatprep.mubr.bf16.mxu0 0
    %871 = vmatmul.mubr.bf16.gmra.mrb[0].mxu0 %v833
    %v872 = vpop.f32.mrb[0].mxu0
    %v873 = vadd.f32 0.0, %v872
    %v874 = vpop.f32.mrb[0].mxu0
    %v875 = vpop.f32.mrb[0].mxu0
    %v876 = vpop.f32.mrb[0].mxu0
    %877 = vdwg.mxu0
    %879 = vrot.lane.b32.xlu0 %v678, 112
    %v880 = vpop.permute.xlu0 %879
    %v882 = vsel %vm505, %v670, 0
    %v885 = vsel %vm505, %v880, 0
    %887 = vmatprep.subr.bf16.mxu0 0
    %888 = vmatpush1.bf16.xpose.msra.mxu0 %v885
    %889 = vmatprep.subr.bf16.mxu0 0
    %890 = vmatpush1.bf16.xpose.msra.mxu0 0
    %891 = vmatprep.subr.bf16.mxu0 0
    %892 = vmatpush1.bf16.xpose.msra.mxu0 0
    %893 = vmatprep.subr.bf16.mxu0 0
    %894 = vmatpush1.bf16.xpose.msra.mxu0 0
    %895 = vmatprep.subr.bf16.mxu0 0
    %896 = vmatpush1.bf16.xpose.msra.mxu0 0
    %897 = vmatprep.subr.bf16.mxu0 0
    %898 = vmatpush1.bf16.xpose.msra.mxu0 0
    %899 = vmatprep.subr.bf16.mxu0 0
    %900 = vmatpush1.bf16.xpose.msra.mxu0 0
    %901 = vmatprep.subr.bf16.mxu0 0
    %902 = vmatpush1.bf16.xpose.msra.mxu0 0
    %903 = vmatprep.subr.bf16.mxu0 0
    %904 = vmatpush1.bf16.xpose.msra.mxu0 0
    %905 = vmatprep.subr.bf16.mxu0 0
    %906 = vmatpush1.bf16.xpose.msra.mxu0 0
    %907 = vmatprep.subr.bf16.mxu0 0
    %908 = vmatpush1.bf16.xpose.msra.mxu0 0
    %909 = vmatprep.subr.bf16.mxu0 0
    %910 = vmatpush1.bf16.xpose.msra.mxu0 0
    %911 = vmatprep.subr.bf16.mxu0 0
    %912 = vmatpush1.bf16.xpose.msra.mxu0 0
    %913 = vmatprep.subr.bf16.mxu0 0
    %914 = vmatpush1.bf16.xpose.msra.mxu0 0
    %915 = vmatprep.subr.bf16.mxu0 0
    %916 = vmatpush1.bf16.xpose.msra.mxu0 0
    %917 = vmatprep.subr.bf16.mxu0 0
    %918 = vmatpush1.bf16.xpose.msra.mxu0 0
    %919 = vmatprep.mubr.bf16.mxu0 0
    %920 = vmatmul.mubr.bf16.gmra.mrb[0].mxu0 %v882
    %v921 = vpop.f32.mrb[0].mxu0
    %v922 = vadd.f32 0.0, %v921
    %v923 = vpop.f32.mrb[0].mxu0
    %v924 = vpop.f32.mrb[0].mxu0
    %v925 = vpop.f32.mrb[0].mxu0
    %926 = vdwg.mxu0
    %928 = vrot.lane.b32.xlu0 %v679, 112
    %v929 = vpop.permute.xlu0 %928
    %v931 = vsel %vm505, %v671, 0
    %v934 = vsel %vm505, %v929, 0
    %936 = vmatprep.subr.bf16.mxu0 0
    %937 = vmatpush1.bf16.xpose.msra.mxu0 %v934
    %938 = vmatprep.subr.bf16.mxu0 0
    %939 = vmatpush1.bf16.xpose.msra.mxu0 0
    %940 = vmatprep.subr.bf16.mxu0 0
    %941 = vmatpush1.bf16.xpose.msra.mxu0 0
    %942 = vmatprep.subr.bf16.mxu0 0
    %943 = vmatpush1.bf16.xpose.msra.mxu0 0
    %944 = vmatprep.subr.bf16.mxu0 0
    %945 = vmatpush1.bf16.xpose.msra.mxu0 0
    %946 = vmatprep.subr.bf16.mxu0 0
    %947 = vmatpush1.bf16.xpose.msra.mxu0 0
    %948 = vmatprep.subr.bf16.mxu0 0
    %949 = vmatpush1.bf16.xpose.msra.mxu0 0
    %950 = vmatprep.subr.bf16.mxu0 0
    %951 = vmatpush1.bf16.xpose.msra.mxu0 0
    %952 = vmatprep.subr.bf16.mxu0 0
    %953 = vmatpush1.bf16.xpose.msra.mxu0 0
    %954 = vmatprep.subr.bf16.mxu0 0
    %955 = vmatpush1.bf16.xpose.msra.mxu0 0
    %956 = vmatprep.subr.bf16.mxu0 0
    %957 = vmatpush1.bf16.xpose.msra.mxu0 0
    %958 = vmatprep.subr.bf16.mxu0 0
    %959 = vmatpush1.bf16.xpose.msra.mxu0 0
    %960 = vmatprep.subr.bf16.mxu0 0
    %961 = vmatpush1.bf16.xpose.msra.mxu0 0
    %962 = vmatprep.subr.bf16.mxu0 0
    %963 = vmatpush1.bf16.xpose.msra.mxu0 0
    %964 = vmatprep.subr.bf16.mxu0 0
    %965 = vmatpush1.bf16.xpose.msra.mxu0 0
    %966 = vmatprep.subr.bf16.mxu0 0
    %967 = vmatpush1.bf16.xpose.msra.mxu0 0
    %968 = vmatprep.mubr.bf16.mxu0 0
    %969 = vmatmul.mubr.bf16.gmra.mrb[0].mxu0 %v931
    %v970 = vpop.f32.mrb[0].mxu0
    %v971 = vadd.f32 0.0, %v970
    %v972 = vpop.f32.mrb[0].mxu0
    %v973 = vpop.f32.mrb[0].mxu0
    %v974 = vpop.f32.mrb[0].mxu0
    %975 = vdwg.mxu0
    %977 = vrot.lane.b32.xlu0 %v680, 112
    %v978 = vpop.permute.xlu0 %977
    %v980 = vsel %vm505, %v672, 0
    %v983 = vsel %vm505, %v978, 0
    %985 = vmatprep.subr.bf16.mxu0 0
    %986 = vmatpush1.bf16.xpose.msra.mxu0 %v983
    %987 = vmatprep.subr.bf16.mxu0 0
    %988 = vmatpush1.bf16.xpose.msra.mxu0 0
    %989 = vmatprep.subr.bf16.mxu0 0
    %990 = vmatpush1.bf16.xpose.msra.mxu0 0
    %991 = vmatprep.subr.bf16.mxu0 0
    %992 = vmatpush1.bf16.xpose.msra.mxu0 0
    %993 = vmatprep.subr.bf16.mxu0 0
    %994 = vmatpush1.bf16.xpose.msra.mxu0 0
    %995 = vmatprep.subr.bf16.mxu0 0
    %996 = vmatpush1.bf16.xpose.msra.mxu0 0
    %997 = vmatprep.subr.bf16.mxu0 0
    %998 = vmatpush1.bf16.xpose.msra.mxu0 0
    %999 = vmatprep.subr.bf16.mxu0 0
    %1000 = vmatpush1.bf16.xpose.msra.mxu0 0
    %1001 = vmatprep.subr.bf16.mxu0 0
    %1002 = vmatpush1.bf16.xpose.msra.mxu0 0
    %1003 = vmatprep.subr.bf16.mxu0 0
    %1004 = vmatpush1.bf16.xpose.msra.mxu0 0
    %1005 = vmatprep.subr.bf16.mxu0 0
    %1006 = vmatpush1.bf16.xpose.msra.mxu0 0
    %1007 = vmatprep.subr.bf16.mxu0 0
    %1008 = vmatpush1.bf16.xpose.msra.mxu0 0
    %1009 = vmatprep.subr.bf16.mxu0 0
    %1010 = vmatpush1.bf16.xpose.msra.mxu0 0
    %1011 = vmatprep.subr.bf16.mxu0 0
    %1012 = vmatpush1.bf16.xpose.msra.mxu0 0
    %1013 = vmatprep.subr.bf16.mxu0 0
    %1014 = vmatpush1.bf16.xpose.msra.mxu0 0
    %1015 = vmatprep.subr.bf16.mxu0 0
    %1016 = vmatpush1.bf16.xpose.msra.mxu0 0
    %1017 = vmatprep.mubr.bf16.mxu0 0
    %1018 = vmatmul.mubr.bf16.gmra.mrb[0].mxu0 %v980
    %v1019 = vpop.f32.mrb[0].mxu0
    %v1020 = vadd.f32 0.0, %v1019
    %v1021 = vpop.f32.mrb[0].mxu0
    %v1022 = vpop.f32.mrb[0].mxu0
    %v1023 = vpop.f32.mrb[0].mxu0
    %1024 = vdwg.mxu0
    %1026 = vrot.lane.b32.xlu0 %v681, 112
    %v1027 = vpop.permute.xlu0 %1026
    %v1029 = vsel %vm505, %v673, 0
    %v1032 = vsel %vm505, %v1027, 0
    %1034 = vmatprep.subr.bf16.mxu0 0
    %1035 = vmatpush1.bf16.xpose.msra.mxu0 %v1032
    %1036 = vmatprep.subr.bf16.mxu0 0
    %1037 = vmatpush1.bf16.xpose.msra.mxu0 0
    %1038 = vmatprep.subr.bf16.mxu0 0
    %1039 = vmatpush1.bf16.xpose.msra.mxu0 0
    %1040 = vmatprep.subr.bf16.mxu0 0
    %1041 = vmatpush1.bf16.xpose.msra.mxu0 0
    %1042 = vmatprep.subr.bf16.mxu0 0
    %1043 = vmatpush1.bf16.xpose.msra.mxu0 0
    %1044 = vmatprep.subr.bf16.mxu0 0
    %1045 = vmatpush1.bf16.xpose.msra.mxu0 0
    %1046 = vmatprep.subr.bf16.mxu0 0
    %1047 = vmatpush1.bf16.xpose.msra.mxu0 0
    %1048 = vmatprep.subr.bf16.mxu0 0
    %1049 = vmatpush1.bf16.xpose.msra.mxu0 0
    %1050 = vmatprep.subr.bf16.mxu0 0
    %1051 = vmatpush1.bf16.xpose.msra.mxu0 0
    %1052 = vmatprep.subr.bf16.mxu0 0
    %1053 = vmatpush1.bf16.xpose.msra.mxu0 0
    %1054 = vmatprep.subr.bf16.mxu0 0
    %1055 = vmatpush1.bf16.xpose.msra.mxu0 0
    %1056 = vmatprep.subr.bf16.mxu0 0
    %1057 = vmatpush1.bf16.xpose.msra.mxu0 0
    %1058 = vmatprep.subr.bf16.mxu0 0
    %1059 = vmatpush1.bf16.xpose.msra.mxu0 0
    %1060 = vmatprep.subr.bf16.mxu0 0
    %1061 = vmatpush1.bf16.xpose.msra.mxu0 0
    %1062 = vmatprep.subr.bf16.mxu0 0
    %1063 = vmatpush1.bf16.xpose.msra.mxu0 0
    %1064 = vmatprep.subr.bf16.mxu0 0
    %1065 = vmatpush1.bf16.xpose.msra.mxu0 0
    %1066 = vmatprep.mubr.bf16.mxu0 0
    %1067 = vmatmul.mubr.bf16.gmra.mrb[0].mxu0 %v1029
    %v1068 = vpop.f32.mrb[0].mxu0
    %v1069 = vadd.f32 0.0, %v1068
    %v1070 = vpop.f32.mrb[0].mxu0
    %v1071 = vpop.f32.mrb[0].mxu0
    %v1072 = vpop.f32.mrb[0].mxu0
    %1073 = vdwg.mxu0
    %v1074 = vmul.f32 %v726, 1.442695
    %v1075 = vpow.pop %v1074
    %v1076 = vmul.f32 %v775, 1.442695
    %v1077 = vpow.pop %v1076
    %v1078 = vmul.f32 %v824, 1.442695
    %v1079 = vpow.pop %v1078
    %v1080 = vmul.f32 %v873, 1.442695
    %v1081 = vpow.pop %v1080
    %v1082 = vmul.f32 %v922, 1.442695
    %v1083 = vpow.pop %v1082
    %v1084 = vmul.f32 %v971, 1.442695
    %v1085 = vpow.pop %v1084
    %v1086 = vmul.f32 %v1020, 1.442695
    %v1087 = vpow.pop %v1086
    %v1088 = vmul.f32 %v1069, 1.442695
    %v1089 = vpow.pop %v1088
    %vm1090 = vcmask 64512
    %v1091 = vsel %vm1090, %v1075, 0.0
    %1092 = vadd.xlane.f32.xlu0 %v1091
    %v1093 = vpop.xlane.xlu0 %1092
    %v1094 = vsel %vm1090, %v1077, 0.0
    %1095 = vadd.xlane.f32.xlu0 %v1094
    %v1096 = vpop.xlane.xlu0 %1095
    %v1097 = vsel %vm1090, %v1079, 0.0
    %1098 = vadd.xlane.f32.xlu0 %v1097
    %v1099 = vpop.xlane.xlu0 %1098
    %v1100 = vsel %vm1090, %v1081, 0.0
    %1101 = vadd.xlane.f32.xlu0 %v1100
    %v1102 = vpop.xlane.xlu0 %1101
    %v1103 = vsel %vm1090, %v1083, 0.0
    %1104 = vadd.xlane.f32.xlu0 %v1103
    %v1105 = vpop.xlane.xlu0 %1104
    %v1106 = vsel %vm1090, %v1085, 0.0
    %1107 = vadd.xlane.f32.xlu0 %v1106
    %v1108 = vpop.xlane.xlu0 %1107
    %v1109 = vsel %vm1090, %v1087, 0.0
    %1110 = vadd.xlane.f32.xlu0 %v1109
    %v1111 = vpop.xlane.xlu0 %1110
    %v1112 = vsel %vm1090, %v1089, 0.0
    %1113 = vadd.xlane.f32.xlu0 %v1112
    %v1114 = vpop.xlane.xlu0 %1113
    %v1115 = vrcp.pop %v1093
    %v1116 = vrcp.pop %v1096
    %v1117 = vrcp.pop %v1099
    %v1118 = vrcp.pop %v1102
    %v1119 = vrcp.pop %v1105
    %v1120 = vrcp.pop %v1108
    %v1121 = vrcp.pop %v1111
    %v1122 = vrcp.pop %v1114
    %v1123 = vmul.f32 %v1075, %v1115
    %v1124 = vmul.f32 %v1077, %v1116
    %v1125 = vmul.f32 %v1079, %v1117
    %v1126 = vmul.f32 %v1081, %v1118
    %v1127 = vmul.f32 %v1083, %v1119
    %v1128 = vmul.f32 %v1085, %v1120
    %v1129 = vmul.f32 %v1087, %v1121
    %v1130 = vmul.f32 %v1089, %v1122
    %v1131 = vpack.c.bf16 %v1123, %v1123
    %v1132 = vpack.c.bf16 %v1124, %v1124
    %v1133 = vpack.c.bf16 %v1125, %v1125
    %v1134 = vpack.c.bf16 %v1126, %v1126
    %v1135 = vpack.c.bf16 %v1127, %v1127
    %v1136 = vpack.c.bf16 %v1128, %v1128
    %v1137 = vpack.c.bf16 %v1129, %v1129
    %v1138 = vpack.c.bf16 %v1130, %v1130
    %v1139 = vpack.c.bf16 %v173, %v173
    %v1140 = vpack.c.bf16 %v225, %v225
    %v1141 = vpack.c.bf16 %v277, %v277
    %v1142 = vpack.c.bf16 %v329, %v329
    %v1143 = vpack.c.bf16 %v372, %v372
    %v1144 = vpack.c.bf16 %v412, %v412
    %v1145 = vpack.c.bf16 %v452, %v452
    %v1146 = vpack.c.bf16 %v492, %v492
    %1148 = vrot.lane.b32.xlu0 %v1139, 96
    %v1149 = vpop.permute.xlu0 %1148
    %v1151 = vsel %vm1090, %v1131, 0
    %vm1153 = vcmask 1043456
    %v1155 = vsel %vm1153, %v1149, 0
    %1157 = vmatprep.subr.bf16.mxu0 0
    %1158 = vmatpush1.bf16.msra.mxu0 %v1155
    %1159 = vmatprep.subr.bf16.mxu0 0
    %1160 = vmatpush1.bf16.msra.mxu0 0
    %1161 = vmatprep.subr.bf16.mxu0 0
    %1162 = vmatpush1.bf16.msra.mxu0 0
    %1163 = vmatprep.subr.bf16.mxu0 0
    %1164 = vmatpush1.bf16.msra.mxu0 0
    %1165 = vmatprep.subr.bf16.mxu0 0
    %1166 = vmatpush1.bf16.msra.mxu0 0
    %1167 = vmatprep.subr.bf16.mxu0 0
    %1168 = vmatpush1.bf16.msra.mxu0 0
    %1169 = vmatprep.subr.bf16.mxu0 0
    %1170 = vmatpush1.bf16.msra.mxu0 0
    %1171 = vmatprep.subr.bf16.mxu0 0
    %1172 = vmatpush1.bf16.msra.mxu0 0
    %1173 = vmatprep.subr.bf16.mxu0 0
    %1174 = vmatpush1.bf16.msra.mxu0 0
    %1175 = vmatprep.subr.bf16.mxu0 0
    %1176 = vmatpush1.bf16.msra.mxu0 0
    %1177 = vmatprep.subr.bf16.mxu0 0
    %1178 = vmatpush1.bf16.msra.mxu0 0
    %1179 = vmatprep.subr.bf16.mxu0 0
    %1180 = vmatpush1.bf16.msra.mxu0 0
    %1181 = vmatprep.subr.bf16.mxu0 0
    %1182 = vmatpush1.bf16.msra.mxu0 0
    %1183 = vmatprep.subr.bf16.mxu0 0
    %1184 = vmatpush1.bf16.msra.mxu0 0
    %1185 = vmatprep.subr.bf16.mxu0 0
    %1186 = vmatpush1.bf16.msra.mxu0 0
    %1187 = vmatprep.subr.bf16.mxu0 0
    %1188 = vmatpush1.bf16.msra.mxu0 0
    %1189 = vmatprep.mubr.bf16.mxu0 0
    %1190 = vmatmul.mubr.bf16.gmra.mrb[0].mxu0 %v1151
    %v1191 = vpop.f32.mrb[0].mxu0
    %v1192 = vadd.f32 0.0, %v1191
    %v1193 = vpop.f32.mrb[0].mxu0
    %v1194 = vpop.f32.mrb[0].mxu0
    %v1195 = vpop.f32.mrb[0].mxu0
    %1196 = vdwg.mxu0
    %1198 = vrot.lane.b32.xlu0 %v1140, 96
    %v1199 = vpop.permute.xlu0 %1198
    %v1201 = vsel %vm1090, %v1132, 0
    %v1204 = vsel %vm1153, %v1199, 0
    %1206 = vmatprep.subr.bf16.mxu0 0
    %1207 = vmatpush1.bf16.msra.mxu0 %v1204
    %1208 = vmatprep.subr.bf16.mxu0 0
    %1209 = vmatpush1.bf16.msra.mxu0 0
    %1210 = vmatprep.subr.bf16.mxu0 0
    %1211 = vmatpush1.bf16.msra.mxu0 0
    %1212 = vmatprep.subr.bf16.mxu0 0
    %1213 = vmatpush1.bf16.msra.mxu0 0
    %1214 = vmatprep.subr.bf16.mxu0 0
    %1215 = vmatpush1.bf16.msra.mxu0 0
    %1216 = vmatprep.subr.bf16.mxu0 0
    %1217 = vmatpush1.bf16.msra.mxu0 0
    %1218 = vmatprep.subr.bf16.mxu0 0
    %1219 = vmatpush1.bf16.msra.mxu0 0
    %1220 = vmatprep.subr.bf16.mxu0 0
    %1221 = vmatpush1.bf16.msra.mxu0 0
    %1222 = vmatprep.subr.bf16.mxu0 0
    %1223 = vmatpush1.bf16.msra.mxu0 0
    %1224 = vmatprep.subr.bf16.mxu0 0
    %1225 = vmatpush1.bf16.msra.mxu0 0
    %1226 = vmatprep.subr.bf16.mxu0 0
    %1227 = vmatpush1.bf16.msra.mxu0 0
    %1228 = vmatprep.subr.bf16.mxu0 0
    %1229 = vmatpush1.bf16.msra.mxu0 0
    %1230 = vmatprep.subr.bf16.mxu0 0
    %1231 = vmatpush1.bf16.msra.mxu0 0
    %1232 = vmatprep.subr.bf16.mxu0 0
    %1233 = vmatpush1.bf16.msra.mxu0 0
    %1234 = vmatprep.subr.bf16.mxu0 0
    %1235 = vmatpush1.bf16.msra.mxu0 0
    %1236 = vmatprep.subr.bf16.mxu0 0
    %1237 = vmatpush1.bf16.msra.mxu0 0
    %1238 = vmatprep.mubr.bf16.mxu0 0
    %1239 = vmatmul.mubr.bf16.gmra.mrb[0].mxu0 %v1201
    %v1240 = vpop.f32.mrb[0].mxu0
    %v1241 = vadd.f32 0.0, %v1240
    %v1242 = vpop.f32.mrb[0].mxu0
    %v1243 = vpop.f32.mrb[0].mxu0
    %v1244 = vpop.f32.mrb[0].mxu0
    %1245 = vdwg.mxu0
    %1247 = vrot.lane.b32.xlu0 %v1141, 96
    %v1248 = vpop.permute.xlu0 %1247
    %v1250 = vsel %vm1090, %v1133, 0
    %v1253 = vsel %vm1153, %v1248, 0
    %1255 = vmatprep.subr.bf16.mxu0 0
    %1256 = vmatpush1.bf16.msra.mxu0 %v1253
    %1257 = vmatprep.subr.bf16.mxu0 0
    %1258 = vmatpush1.bf16.msra.mxu0 0
    %1259 = vmatprep.subr.bf16.mxu0 0
    %1260 = vmatpush1.bf16.msra.mxu0 0
    %1261 = vmatprep.subr.bf16.mxu0 0
    %1262 = vmatpush1.bf16.msra.mxu0 0
    %1263 = vmatprep.subr.bf16.mxu0 0
    %1264 = vmatpush1.bf16.msra.mxu0 0
    %1265 = vmatprep.subr.bf16.mxu0 0
    %1266 = vmatpush1.bf16.msra.mxu0 0
    %1267 = vmatprep.subr.bf16.mxu0 0
    %1268 = vmatpush1.bf16.msra.mxu0 0
    %1269 = vmatprep.subr.bf16.mxu0 0
    %1270 = vmatpush1.bf16.msra.mxu0 0
    %1271 = vmatprep.subr.bf16.mxu0 0
    %1272 = vmatpush1.bf16.msra.mxu0 0
    %1273 = vmatprep.subr.bf16.mxu0 0
    %1274 = vmatpush1.bf16.msra.mxu0 0
    %1275 = vmatprep.subr.bf16.mxu0 0
    %1276 = vmatpush1.bf16.msra.mxu0 0
    %1277 = vmatprep.subr.bf16.mxu0 0
    %1278 = vmatpush1.bf16.msra.mxu0 0
    %1279 = vmatprep.subr.bf16.mxu0 0
    %1280 = vmatpush1.bf16.msra.mxu0 0
    %1281 = vmatprep.subr.bf16.mxu0 0
    %1282 = vmatpush1.bf16.msra.mxu0 0
    %1283 = vmatprep.subr.bf16.mxu0 0
    %1284 = vmatpush1.bf16.msra.mxu0 0
    %1285 = vmatprep.subr.bf16.mxu0 0
    %1286 = vmatpush1.bf16.msra.mxu0 0
    %1287 = vmatprep.mubr.bf16.mxu0 0
    %1288 = vmatmul.mubr.bf16.gmra.mrb[0].mxu0 %v1250
    %v1289 = vpop.f32.mrb[0].mxu0
    %v1290 = vadd.f32 0.0, %v1289
    %v1291 = vpop.f32.mrb[0].mxu0
    %v1292 = vpop.f32.mrb[0].mxu0
    %v1293 = vpop.f32.mrb[0].mxu0
    %1294 = vdwg.mxu0
    %1296 = vrot.lane.b32.xlu0 %v1142, 96
    %v1297 = vpop.permute.xlu0 %1296
    %v1299 = vsel %vm1090, %v1134, 0
    %v1302 = vsel %vm1153, %v1297, 0
    %1304 = vmatprep.subr.bf16.mxu0 0
    %1305 = vmatpush1.bf16.msra.mxu0 %v1302
    %1306 = vmatprep.subr.bf16.mxu0 0
    %1307 = vmatpush1.bf16.msra.mxu0 0
    %1308 = vmatprep.subr.bf16.mxu0 0
    %1309 = vmatpush1.bf16.msra.mxu0 0
    %1310 = vmatprep.subr.bf16.mxu0 0
    %1311 = vmatpush1.bf16.msra.mxu0 0
    %1312 = vmatprep.subr.bf16.mxu0 0
    %1313 = vmatpush1.bf16.msra.mxu0 0
    %1314 = vmatprep.subr.bf16.mxu0 0
    %1315 = vmatpush1.bf16.msra.mxu0 0
    %1316 = vmatprep.subr.bf16.mxu0 0
    %1317 = vmatpush1.bf16.msra.mxu0 0
    %1318 = vmatprep.subr.bf16.mxu0 0
    %1319 = vmatpush1.bf16.msra.mxu0 0
    %1320 = vmatprep.subr.bf16.mxu0 0
    %1321 = vmatpush1.bf16.msra.mxu0 0
    %1322 = vmatprep.subr.bf16.mxu0 0
    %1323 = vmatpush1.bf16.msra.mxu0 0
    %1324 = vmatprep.subr.bf16.mxu0 0
    %1325 = vmatpush1.bf16.msra.mxu0 0
    %1326 = vmatprep.subr.bf16.mxu0 0
    %1327 = vmatpush1.bf16.msra.mxu0 0
    %1328 = vmatprep.subr.bf16.mxu0 0
    %1329 = vmatpush1.bf16.msra.mxu0 0
    %1330 = vmatprep.subr.bf16.mxu0 0
    %1331 = vmatpush1.bf16.msra.mxu0 0
    %1332 = vmatprep.subr.bf16.mxu0 0
    %1333 = vmatpush1.bf16.msra.mxu0 0
    %1334 = vmatprep.subr.bf16.mxu0 0
    %1335 = vmatpush1.bf16.msra.mxu0 0
    %1336 = vmatprep.mubr.bf16.mxu0 0
    %1337 = vmatmul.mubr.bf16.gmra.mrb[0].mxu0 %v1299
    %v1338 = vpop.f32.mrb[0].mxu0
    %v1339 = vadd.f32 0.0, %v1338
    %v1340 = vpop.f32.mrb[0].mxu0
    %v1341 = vpop.f32.mrb[0].mxu0
    %v1342 = vpop.f32.mrb[0].mxu0
    %1343 = vdwg.mxu0
    %1345 = vrot.lane.b32.xlu0 %v1143, 96
    %v1346 = vpop.permute.xlu0 %1345
    %v1348 = vsel %vm1090, %v1135, 0
    %v1351 = vsel %vm1153, %v1346, 0
    %1353 = vmatprep.subr.bf16.mxu0 0
    %1354 = vmatpush1.bf16.msra.mxu0 %v1351
    %1355 = vmatprep.subr.bf16.mxu0 0
    %1356 = vmatpush1.bf16.msra.mxu0 0
    %1357 = vmatprep.subr.bf16.mxu0 0
    %1358 = vmatpush1.bf16.msra.mxu0 0
    %1359 = vmatprep.subr.bf16.mxu0 0
    %1360 = vmatpush1.bf16.msra.mxu0 0
    %1361 = vmatprep.subr.bf16.mxu0 0
    %1362 = vmatpush1.bf16.msra.mxu0 0
    %1363 = vmatprep.subr.bf16.mxu0 0
    %1364 = vmatpush1.bf16.msra.mxu0 0
    %1365 = vmatprep.subr.bf16.mxu0 0
    %1366 = vmatpush1.bf16.msra.mxu0 0
    %1367 = vmatprep.subr.bf16.mxu0 0
    %1368 = vmatpush1.bf16.msra.mxu0 0
    %1369 = vmatprep.subr.bf16.mxu0 0
    %1370 = vmatpush1.bf16.msra.mxu0 0
    %1371 = vmatprep.subr.bf16.mxu0 0
    %1372 = vmatpush1.bf16.msra.mxu0 0
    %1373 = vmatprep.subr.bf16.mxu0 0
    %1374 = vmatpush1.bf16.msra.mxu0 0
    %1375 = vmatprep.subr.bf16.mxu0 0
    %1376 = vmatpush1.bf16.msra.mxu0 0
    %1377 = vmatprep.subr.bf16.mxu0 0
    %1378 = vmatpush1.bf16.msra.mxu0 0
    %1379 = vmatprep.subr.bf16.mxu0 0
    %1380 = vmatpush1.bf16.msra.mxu0 0
    %1381 = vmatprep.subr.bf16.mxu0 0
    %1382 = vmatpush1.bf16.msra.mxu0 0
    %1383 = vmatprep.subr.bf16.mxu0 0
    %1384 = vmatpush1.bf16.msra.mxu0 0
    %1385 = vmatprep.mubr.bf16.mxu0 0
    %1386 = vmatmul.mubr.bf16.gmra.mrb[0].mxu0 %v1348
    %v1387 = vpop.f32.mrb[0].mxu0
    %v1388 = vadd.f32 0.0, %v1387
    %v1389 = vpop.f32.mrb[0].mxu0
    %v1390 = vpop.f32.mrb[0].mxu0
    %v1391 = vpop.f32.mrb[0].mxu0
    %1392 = vdwg.mxu0
    %1394 = vrot.lane.b32.xlu0 %v1144, 96
    %v1395 = vpop.permute.xlu0 %1394
    %v1397 = vsel %vm1090, %v1136, 0
    %v1400 = vsel %vm1153, %v1395, 0
    %1402 = vmatprep.subr.bf16.mxu0 0
    %1403 = vmatpush1.bf16.msra.mxu0 %v1400
    %1404 = vmatprep.subr.bf16.mxu0 0
    %1405 = vmatpush1.bf16.msra.mxu0 0
    %1406 = vmatprep.subr.bf16.mxu0 0
    %1407 = vmatpush1.bf16.msra.mxu0 0
    %1408 = vmatprep.subr.bf16.mxu0 0
    %1409 = vmatpush1.bf16.msra.mxu0 0
    %1410 = vmatprep.subr.bf16.mxu0 0
    %1411 = vmatpush1.bf16.msra.mxu0 0
    %1412 = vmatprep.subr.bf16.mxu0 0
    %1413 = vmatpush1.bf16.msra.mxu0 0
    %1414 = vmatprep.subr.bf16.mxu0 0
    %1415 = vmatpush1.bf16.msra.mxu0 0
    %1416 = vmatprep.subr.bf16.mxu0 0
    %1417 = vmatpush1.bf16.msra.mxu0 0
    %1418 = vmatprep.subr.bf16.mxu0 0
    %1419 = vmatpush1.bf16.msra.mxu0 0
    %1420 = vmatprep.subr.bf16.mxu0 0
    %1421 = vmatpush1.bf16.msra.mxu0 0
    %1422 = vmatprep.subr.bf16.mxu0 0
    %1423 = vmatpush1.bf16.msra.mxu0 0
    %1424 = vmatprep.subr.bf16.mxu0 0
    %1425 = vmatpush1.bf16.msra.mxu0 0
    %1426 = vmatprep.subr.bf16.mxu0 0
    %1427 = vmatpush1.bf16.msra.mxu0 0
    %1428 = vmatprep.subr.bf16.mxu0 0
    %1429 = vmatpush1.bf16.msra.mxu0 0
    %1430 = vmatprep.subr.bf16.mxu0 0
    %1431 = vmatpush1.bf16.msra.mxu0 0
    %1432 = vmatprep.subr.bf16.mxu0 0
    %1433 = vmatpush1.bf16.msra.mxu0 0
    %1434 = vmatprep.mubr.bf16.mxu0 0
    %1435 = vmatmul.mubr.bf16.gmra.mrb[0].mxu0 %v1397
    %v1436 = vpop.f32.mrb[0].mxu0
    %v1437 = vadd.f32 0.0, %v1436
    %v1438 = vpop.f32.mrb[0].mxu0
    %v1439 = vpop.f32.mrb[0].mxu0
    %v1440 = vpop.f32.mrb[0].mxu0
    %1441 = vdwg.mxu0
    %1443 = vrot.lane.b32.xlu0 %v1145, 96
    %v1444 = vpop.permute.xlu0 %1443
    %v1446 = vsel %vm1090, %v1137, 0
    %v1449 = vsel %vm1153, %v1444, 0
    %1451 = vmatprep.subr.bf16.mxu0 0
    %1452 = vmatpush1.bf16.msra.mxu0 %v1449
    %1453 = vmatprep.subr.bf16.mxu0 0
    %1454 = vmatpush1.bf16.msra.mxu0 0
    %1455 = vmatprep.subr.bf16.mxu0 0
    %1456 = vmatpush1.bf16.msra.mxu0 0
    %1457 = vmatprep.subr.bf16.mxu0 0
    %1458 = vmatpush1.bf16.msra.mxu0 0
    %1459 = vmatprep.subr.bf16.mxu0 0
    %1460 = vmatpush1.bf16.msra.mxu0 0
    %1461 = vmatprep.subr.bf16.mxu0 0
    %1462 = vmatpush1.bf16.msra.mxu0 0
    %1463 = vmatprep.subr.bf16.mxu0 0
    %1464 = vmatpush1.bf16.msra.mxu0 0
    %1465 = vmatprep.subr.bf16.mxu0 0
    %1466 = vmatpush1.bf16.msra.mxu0 0
    %1467 = vmatprep.subr.bf16.mxu0 0
    %1468 = vmatpush1.bf16.msra.mxu0 0
    %1469 = vmatprep.subr.bf16.mxu0 0
    %1470 = vmatpush1.bf16.msra.mxu0 0
    %1471 = vmatprep.subr.bf16.mxu0 0
    %1472 = vmatpush1.bf16.msra.mxu0 0
    %1473 = vmatprep.subr.bf16.mxu0 0
    %1474 = vmatpush1.bf16.msra.mxu0 0
    %1475 = vmatprep.subr.bf16.mxu0 0
    %1476 = vmatpush1.bf16.msra.mxu0 0
    %1477 = vmatprep.subr.bf16.mxu0 0
    %1478 = vmatpush1.bf16.msra.mxu0 0
    %1479 = vmatprep.subr.bf16.mxu0 0
    %1480 = vmatpush1.bf16.msra.mxu0 0
    %1481 = vmatprep.subr.bf16.mxu0 0
    %1482 = vmatpush1.bf16.msra.mxu0 0
    %1483 = vmatprep.mubr.bf16.mxu0 0
    %1484 = vmatmul.mubr.bf16.gmra.mrb[0].mxu0 %v1446
    %v1485 = vpop.f32.mrb[0].mxu0
    %v1486 = vadd.f32 0.0, %v1485
    %v1487 = vpop.f32.mrb[0].mxu0
    %v1488 = vpop.f32.mrb[0].mxu0
    %v1489 = vpop.f32.mrb[0].mxu0
    %1490 = vdwg.mxu0
    %1492 = vrot.lane.b32.xlu0 %v1146, 96
    %v1493 = vpop.permute.xlu0 %1492
    %v1495 = vsel %vm1090, %v1138, 0
    %v1498 = vsel %vm1153, %v1493, 0
    %1500 = vmatprep.subr.bf16.mxu0 0
    %1501 = vmatpush1.bf16.msra.mxu0 %v1498
    %1502 = vmatprep.subr.bf16.mxu0 0
    %1503 = vmatpush1.bf16.msra.mxu0 0
    %1504 = vmatprep.subr.bf16.mxu0 0
    %1505 = vmatpush1.bf16.msra.mxu0 0
    %1506 = vmatprep.subr.bf16.mxu0 0
    %1507 = vmatpush1.bf16.msra.mxu0 0
    %1508 = vmatprep.subr.bf16.mxu0 0
    %1509 = vmatpush1.bf16.msra.mxu0 0
    %1510 = vmatprep.subr.bf16.mxu0 0
    %1511 = vmatpush1.bf16.msra.mxu0 0
    %1512 = vmatprep.subr.bf16.mxu0 0
    %1513 = vmatpush1.bf16.msra.mxu0 0
    %1514 = vmatprep.subr.bf16.mxu0 0
    %1515 = vmatpush1.bf16.msra.mxu0 0
    %1516 = vmatprep.subr.bf16.mxu0 0
    %1517 = vmatpush1.bf16.msra.mxu0 0
    %1518 = vmatprep.subr.bf16.mxu0 0
    %1519 = vmatpush1.bf16.msra.mxu0 0
    %1520 = vmatprep.subr.bf16.mxu0 0
    %1521 = vmatpush1.bf16.msra.mxu0 0
    %1522 = vmatprep.subr.bf16.mxu0 0
    %1523 = vmatpush1.bf16.msra.mxu0 0
    %1524 = vmatprep.subr.bf16.mxu0 0
    %1525 = vmatpush1.bf16.msra.mxu0 0
    %1526 = vmatprep.subr.bf16.mxu0 0
    %1527 = vmatpush1.bf16.msra.mxu0 0
    %1528 = vmatprep.subr.bf16.mxu0 0
    %1529 = vmatpush1.bf16.msra.mxu0 0
    %1530 = vmatprep.subr.bf16.mxu0 0
    %1531 = vmatpush1.bf16.msra.mxu0 0
    %1532 = vmatprep.mubr.bf16.mxu0 0
    %1533 = vmatmul.mubr.bf16.gmra.mrb[0].mxu0 %v1495
    %v1534 = vpop.f32.mrb[0].mxu0
    %v1535 = vadd.f32 0.0, %v1534
    %v1536 = vpop.f32.mrb[0].mxu0
    %v1537 = vpop.f32.mrb[0].mxu0
    %v1538 = vpop.f32.mrb[0].mxu0
    %1539 = vdwg.mxu0
    %v1540 = vld [vmem:[#allocation7] sm:$0xf]
    %v1541 = vld [vmem:[#allocation7 + $0x4] sm:$0xf]
    %v1542 = vld [vmem:[#allocation7 + $0x8] sm:$0xf]
    %v1543 = vld [vmem:[#allocation7 + $0xc] sm:$0xf]
    %v1544 = vld [vmem:[#allocation7 + $0x10] sm:$0xf]
    %v1545 = vld [vmem:[#allocation7 + $0x14] sm:$0xf]
    %v1546 = vld [vmem:[#allocation7 + $0x18] sm:$0xf]
    %v1547 = vld [vmem:[#allocation7 + $0x1c] sm:$0xf]
    %v1548 = vpack.c.bf16 %v1192, %v1192
    %v1549 = vpack.c.bf16 %v1241, %v1241
    %v1550 = vpack.c.bf16 %v1290, %v1290
    %v1551 = vpack.c.bf16 %v1339, %v1339
    %v1552 = vpack.c.bf16 %v1388, %v1388
    %v1553 = vpack.c.bf16 %v1437, %v1437
    %v1554 = vpack.c.bf16 %v1486, %v1486
    %v1555 = vpack.c.bf16 %v1535, %v1535
    %v1558 = vunpack.c.l.b16 %v1540
    %v1559 = vunpack.c.l.b16 %v1541
    %v1560 = vpack.c.b16 %v1559, %v1558
    %v1563 = vsel %vm505, %v1548, 0
    %1565 = vmatprep.subr.bf16.mxu0 0
    %1566 = vmatpush1.bf16.msra.mxu0 %v1560
    %1567 = vmatprep.subr.bf16.mxu0 0
    %1568 = vmatpush1.bf16.msra.mxu0 0
    %1569 = vmatprep.subr.bf16.mxu0 0
    %1570 = vmatpush1.bf16.msra.mxu0 0
    %1571 = vmatprep.subr.bf16.mxu0 0
    %1572 = vmatpush1.bf16.msra.mxu0 0
    %1573 = vmatprep.subr.bf16.mxu0 0
    %1574 = vmatpush1.bf16.msra.mxu0 0
    %1575 = vmatprep.subr.bf16.mxu0 0
    %1576 = vmatpush1.bf16.msra.mxu0 0
    %1577 = vmatprep.subr.bf16.mxu0 0
    %1578 = vmatpush1.bf16.msra.mxu0 0
    %1579 = vmatprep.subr.bf16.mxu0 0
    %1580 = vmatpush1.bf16.msra.mxu0 0
    %1581 = vmatprep.subr.bf16.mxu0 0
    %1582 = vmatpush1.bf16.msra.mxu0 0
    %1583 = vmatprep.subr.bf16.mxu0 0
    %1584 = vmatpush1.bf16.msra.mxu0 0
    %1585 = vmatprep.subr.bf16.mxu0 0
    %1586 = vmatpush1.bf16.msra.mxu0 0
    %1587 = vmatprep.subr.bf16.mxu0 0
    %1588 = vmatpush1.bf16.msra.mxu0 0
    %1589 = vmatprep.subr.bf16.mxu0 0
    %1590 = vmatpush1.bf16.msra.mxu0 0
    %1591 = vmatprep.subr.bf16.mxu0 0
    %1592 = vmatpush1.bf16.msra.mxu0 0
    %1593 = vmatprep.subr.bf16.mxu0 0
    %1594 = vmatpush1.bf16.msra.mxu0 0
    %1595 = vmatprep.subr.bf16.mxu0 0
    %1596 = vmatpush1.bf16.msra.mxu0 0
    %1597 = vmatprep.mubr.bf16.mxu0 0
    %1598 = vmatmul.mubr.bf16.gmra.mrb[0].mxu0 %v1563
    %v1599 = vpop.f32.mrb[0].mxu0
    %v1600 = vadd.f32 0.0, %v1599
    %v1601 = vpop.f32.mrb[0].mxu0
    %v1602 = vpop.f32.mrb[0].mxu0
    %v1603 = vpop.f32.mrb[0].mxu0
    %1604 = vdwg.mxu0
    %v1607 = vunpack.c.l.b16 %v1542
    %v1608 = vunpack.c.l.b16 %v1543
    %v1609 = vpack.c.b16 %v1608, %v1607
    %v1612 = vsel %vm505, %v1549, 0
    %1614 = vmatprep.subr.bf16.mxu0 0
    %1615 = vmatpush1.bf16.msra.mxu0 %v1609
    %1616 = vmatprep.subr.bf16.mxu0 0
    %1617 = vmatpush1.bf16.msra.mxu0 0
    %1618 = vmatprep.subr.bf16.mxu0 0
    %1619 = vmatpush1.bf16.msra.mxu0 0
    %1620 = vmatprep.subr.bf16.mxu0 0
    %1621 = vmatpush1.bf16.msra.mxu0 0
    %1622 = vmatprep.subr.bf16.mxu0 0
    %1623 = vmatpush1.bf16.msra.mxu0 0
    %1624 = vmatprep.subr.bf16.mxu0 0
    %1625 = vmatpush1.bf16.msra.mxu0 0
    %1626 = vmatprep.subr.bf16.mxu0 0
    %1627 = vmatpush1.bf16.msra.mxu0 0
    %1628 = vmatprep.subr.bf16.mxu0 0
    %1629 = vmatpush1.bf16.msra.mxu0 0
    %1630 = vmatprep.subr.bf16.mxu0 0
    %1631 = vmatpush1.bf16.msra.mxu0 0
    %1632 = vmatprep.subr.bf16.mxu0 0
    %1633 = vmatpush1.bf16.msra.mxu0 0
    %1634 = vmatprep.subr.bf16.mxu0 0
    %1635 = vmatpush1.bf16.msra.mxu0 0
    %1636 = vmatprep.subr.bf16.mxu0 0
    %1637 = vmatpush1.bf16.msra.mxu0 0
    %1638 = vmatprep.subr.bf16.mxu0 0
    %1639 = vmatpush1.bf16.msra.mxu0 0
    %1640 = vmatprep.subr.bf16.mxu0 0
    %1641 = vmatpush1.bf16.msra.mxu0 0
    %1642 = vmatprep.subr.bf16.mxu0 0
    %1643 = vmatpush1.bf16.msra.mxu0 0
    %1644 = vmatprep.subr.bf16.mxu0 0
    %1645 = vmatpush1.bf16.msra.mxu0 0
    %1646 = vmatprep.mubr.bf16.mxu0 0
    %1647 = vmatmul.mubr.bf16.gmra.mrb[0].mxu0 %v1612
    %v1648 = vpop.f32.mrb[0].mxu0
    %v1649 = vadd.f32 0.0, %v1648
    %v1650 = vpop.f32.mrb[0].mxu0
    %v1651 = vpop.f32.mrb[0].mxu0
    %v1652 = vpop.f32.mrb[0].mxu0
    %1653 = vdwg.mxu0
    %v1656 = vunpack.c.l.b16 %v1544
    %v1657 = vunpack.c.l.b16 %v1545
    %v1658 = vpack.c.b16 %v1657, %v1656
    %v1661 = vsel %vm505, %v1550, 0
    %1663 = vmatprep.subr.bf16.mxu0 0
    %1664 = vmatpush1.bf16.msra.mxu0 %v1658
    %1665 = vmatprep.subr.bf16.mxu0 0
    %1666 = vmatpush1.bf16.msra.mxu0 0
    %1667 = vmatprep.subr.bf16.mxu0 0
    %1668 = vmatpush1.bf16.msra.mxu0 0
    %1669 = vmatprep.subr.bf16.mxu0 0
    %1670 = vmatpush1.bf16.msra.mxu0 0
    %1671 = vmatprep.subr.bf16.mxu0 0
    %1672 = vmatpush1.bf16.msra.mxu0 0
    %1673 = vmatprep.subr.bf16.mxu0 0
    %1674 = vmatpush1.bf16.msra.mxu0 0
    %1675 = vmatprep.subr.bf16.mxu0 0
    %1676 = vmatpush1.bf16.msra.mxu0 0
    %1677 = vmatprep.subr.bf16.mxu0 0
    %1678 = vmatpush1.bf16.msra.mxu0 0
    %1679 = vmatprep.subr.bf16.mxu0 0
    %1680 = vmatpush1.bf16.msra.mxu0 0
    %1681 = vmatprep.subr.bf16.mxu0 0
    %1682 = vmatpush1.bf16.msra.mxu0 0
    %1683 = vmatprep.subr.bf16.mxu0 0
    %1684 = vmatpush1.bf16.msra.mxu0 0
    %1685 = vmatprep.subr.bf16.mxu0 0
    %1686 = vmatpush1.bf16.msra.mxu0 0
    %1687 = vmatprep.subr.bf16.mxu0 0
    %1688 = vmatpush1.bf16.msra.mxu0 0
    %1689 = vmatprep.subr.bf16.mxu0 0
    %1690 = vmatpush1.bf16.msra.mxu0 0
    %1691 = vmatprep.subr.bf16.mxu0 0
    %1692 = vmatpush1.bf16.msra.mxu0 0
    %1693 = vmatprep.subr.bf16.mxu0 0
    %1694 = vmatpush1.bf16.msra.mxu0 0
    %1695 = vmatprep.mubr.bf16.mxu0 0
    %1696 = vmatmul.mubr.bf16.gmra.mrb[0].mxu0 %v1661
    %v1697 = vpop.f32.mrb[0].mxu0
    %v1698 = vadd.f32 0.0, %v1697
    %v1699 = vpop.f32.mrb[0].mxu0
    %v1700 = vpop.f32.mrb[0].mxu0
    %v1701 = vpop.f32.mrb[0].mxu0
    %1702 = vdwg.mxu0
    %v1705 = vunpack.c.l.b16 %v1546
    %v1706 = vunpack.c.l.b16 %v1547
    %v1707 = vpack.c.b16 %v1706, %v1705
    %v1710 = vsel %vm505, %v1551, 0
    %1712 = vmatprep.subr.bf16.mxu0 0
    %1713 = vmatpush1.bf16.msra.mxu0 %v1707
    %1714 = vmatprep.subr.bf16.mxu0 0
    %1715 = vmatpush1.bf16.msra.mxu0 0
    %1716 = vmatprep.subr.bf16.mxu0 0
    %1717 = vmatpush1.bf16.msra.mxu0 0
    %1718 = vmatprep.subr.bf16.mxu0 0
    %1719 = vmatpush1.bf16.msra.mxu0 0
    %1720 = vmatprep.subr.bf16.mxu0 0
    %1721 = vmatpush1.bf16.msra.mxu0 0
    %1722 = vmatprep.subr.bf16.mxu0 0
    %1723 = vmatpush1.bf16.msra.mxu0 0
    %1724 = vmatprep.subr.bf16.mxu0 0
    %1725 = vmatpush1.bf16.msra.mxu0 0
    %1726 = vmatprep.subr.bf16.mxu0 0
    %1727 = vmatpush1.bf16.msra.mxu0 0
    %1728 = vmatprep.subr.bf16.mxu0 0
    %1729 = vmatpush1.bf16.msra.mxu0 0
    %1730 = vmatprep.subr.bf16.mxu0 0
    %1731 = vmatpush1.bf16.msra.mxu0 0
    %1732 = vmatprep.subr.bf16.mxu0 0
    %1733 = vmatpush1.bf16.msra.mxu0 0
    %1734 = vmatprep.subr.bf16.mxu0 0
    %1735 = vmatpush1.bf16.msra.mxu0 0
    %1736 = vmatprep.subr.bf16.mxu0 0
    %1737 = vmatpush1.bf16.msra.mxu0 0
    %1738 = vmatprep.subr.bf16.mxu0 0
    %1739 = vmatpush1.bf16.msra.mxu0 0
    %1740 = vmatprep.subr.bf16.mxu0 0
    %1741 = vmatpush1.bf16.msra.mxu0 0
    %1742 = vmatprep.subr.bf16.mxu0 0
    %1743 = vmatpush1.bf16.msra.mxu0 0
    %1744 = vmatprep.mubr.bf16.mxu0 0
    %1745 = vmatmul.mubr.bf16.gmra.mrb[0].mxu0 %v1710
    %v1746 = vpop.f32.mrb[0].mxu0
    %v1747 = vadd.f32 0.0, %v1746
    %v1748 = vpop.f32.mrb[0].mxu0
    %v1749 = vpop.f32.mrb[0].mxu0
    %v1750 = vpop.f32.mrb[0].mxu0
    %1751 = vdwg.mxu0
    %v1753 = vsel %vm505, %v1552, 0
    %1755 = vmatprep.subr.bf16.mxu0 0
    %1756 = vmatpush1.bf16.msra.mxu0 %v1560
    %1757 = vmatprep.subr.bf16.mxu0 0
    %1758 = vmatpush1.bf16.msra.mxu0 0
    %1759 = vmatprep.subr.bf16.mxu0 0
    %1760 = vmatpush1.bf16.msra.mxu0 0
    %1761 = vmatprep.subr.bf16.mxu0 0
    %1762 = vmatpush1.bf16.msra.mxu0 0
    %1763 = vmatprep.subr.bf16.mxu0 0
    %1764 = vmatpush1.bf16.msra.mxu0 0
    %1765 = vmatprep.subr.bf16.mxu0 0
    %1766 = vmatpush1.bf16.msra.mxu0 0
    %1767 = vmatprep.subr.bf16.mxu0 0
    %1768 = vmatpush1.bf16.msra.mxu0 0
    %1769 = vmatprep.subr.bf16.mxu0 0
    %1770 = vmatpush1.bf16.msra.mxu0 0
    %1771 = vmatprep.subr.bf16.mxu0 0
    %1772 = vmatpush1.bf16.msra.mxu0 0
    %1773 = vmatprep.subr.bf16.mxu0 0
    %1774 = vmatpush1.bf16.msra.mxu0 0
    %1775 = vmatprep.subr.bf16.mxu0 0
    %1776 = vmatpush1.bf16.msra.mxu0 0
    %1777 = vmatprep.subr.bf16.mxu0 0
    %1778 = vmatpush1.bf16.msra.mxu0 0
    %1779 = vmatprep.subr.bf16.mxu0 0
    %1780 = vmatpush1.bf16.msra.mxu0 0
    %1781 = vmatprep.subr.bf16.mxu0 0
    %1782 = vmatpush1.bf16.msra.mxu0 0
    %1783 = vmatprep.subr.bf16.mxu0 0
    %1784 = vmatpush1.bf16.msra.mxu0 0
    %1785 = vmatprep.subr.bf16.mxu0 0
    %1786 = vmatpush1.bf16.msra.mxu0 0
    %1787 = vmatprep.mubr.bf16.mxu0 0
    %1788 = vmatmul.mubr.bf16.gmra.mrb[0].mxu0 %v1753
    %v1789 = vpop.f32.mrb[0].mxu0
    %v1790 = vadd.f32 0.0, %v1789
    %v1791 = vpop.f32.mrb[0].mxu0
    %v1792 = vpop.f32.mrb[0].mxu0
    %v1793 = vpop.f32.mrb[0].mxu0
    %1794 = vdwg.mxu0
    %v1796 = vsel %vm505, %v1553, 0
    %1798 = vmatprep.subr.bf16.mxu0 0
    %1799 = vmatpush1.bf16.msra.mxu0 %v1609
    %1800 = vmatprep.subr.bf16.mxu0 0
    %1801 = vmatpush1.bf16.msra.mxu0 0
    %1802 = vmatprep.subr.bf16.mxu0 0
    %1803 = vmatpush1.bf16.msra.mxu0 0
    %1804 = vmatprep.subr.bf16.mxu0 0
    %1805 = vmatpush1.bf16.msra.mxu0 0
    %1806 = vmatprep.subr.bf16.mxu0 0
    %1807 = vmatpush1.bf16.msra.mxu0 0
    %1808 = vmatprep.subr.bf16.mxu0 0
    %1809 = vmatpush1.bf16.msra.mxu0 0
    %1810 = vmatprep.subr.bf16.mxu0 0
    %1811 = vmatpush1.bf16.msra.mxu0 0
    %1812 = vmatprep.subr.bf16.mxu0 0
    %1813 = vmatpush1.bf16.msra.mxu0 0
    %1814 = vmatprep.subr.bf16.mxu0 0
    %1815 = vmatpush1.bf16.msra.mxu0 0
    %1816 = vmatprep.subr.bf16.mxu0 0
    %1817 = vmatpush1.bf16.msra.mxu0 0
    %1818 = vmatprep.subr.bf16.mxu0 0
    %1819 = vmatpush1.bf16.msra.mxu0 0
    %1820 = vmatprep.subr.bf16.mxu0 0
    %1821 = vmatpush1.bf16.msra.mxu0 0
    %1822 = vmatprep.subr.bf16.mxu0 0
    %1823 = vmatpush1.bf16.msra.mxu0 0
    %1824 = vmatprep.subr.bf16.mxu0 0
    %1825 = vmatpush1.bf16.msra.mxu0 0
    %1826 = vmatprep.subr.bf16.mxu0 0
    %1827 = vmatpush1.bf16.msra.mxu0 0
    %1828 = vmatprep.subr.bf16.mxu0 0
    %1829 = vmatpush1.bf16.msra.mxu0 0
    %1830 = vmatprep.mubr.bf16.mxu0 0
    %1831 = vmatmul.mubr.bf16.gmra.mrb[0].mxu0 %v1796
    %v1832 = vpop.f32.mrb[0].mxu0
    %v1833 = vadd.f32 0.0, %v1832
    %v1834 = vpop.f32.mrb[0].mxu0
    %v1835 = vpop.f32.mrb[0].mxu0
    %v1836 = vpop.f32.mrb[0].mxu0
    %1837 = vdwg.mxu0
    %v1839 = vsel %vm505, %v1554, 0
    %1841 = vmatprep.subr.bf16.mxu0 0
    %1842 = vmatpush1.bf16.msra.mxu0 %v1658
    %1843 = vmatprep.subr.bf16.mxu0 0
    %1844 = vmatpush1.bf16.msra.mxu0 0
    %1845 = vmatprep.subr.bf16.mxu0 0
    %1846 = vmatpush1.bf16.msra.mxu0 0
    %1847 = vmatprep.subr.bf16.mxu0 0
    %1848 = vmatpush1.bf16.msra.mxu0 0
    %1849 = vmatprep.subr.bf16.mxu0 0
    %1850 = vmatpush1.bf16.msra.mxu0 0
    %1851 = vmatprep.subr.bf16.mxu0 0
    %1852 = vmatpush1.bf16.msra.mxu0 0
    %1853 = vmatprep.subr.bf16.mxu0 0
    %1854 = vmatpush1.bf16.msra.mxu0 0
    %1855 = vmatprep.subr.bf16.mxu0 0
    %1856 = vmatpush1.bf16.msra.mxu0 0
    %1857 = vmatprep.subr.bf16.mxu0 0
    %1858 = vmatpush1.bf16.msra.mxu0 0
    %1859 = vmatprep.subr.bf16.mxu0 0
    %1860 = vmatpush1.bf16.msra.mxu0 0
    %1861 = vmatprep.subr.bf16.mxu0 0
    %1862 = vmatpush1.bf16.msra.mxu0 0
    %1863 = vmatprep.subr.bf16.mxu0 0
    %1864 = vmatpush1.bf16.msra.mxu0 0
    %1865 = vmatprep.subr.bf16.mxu0 0
    %1866 = vmatpush1.bf16.msra.mxu0 0
    %1867 = vmatprep.subr.bf16.mxu0 0
    %1868 = vmatpush1.bf16.msra.mxu0 0
    %1869 = vmatprep.subr.bf16.mxu0 0
    %1870 = vmatpush1.bf16.msra.mxu0 0
    %1871 = vmatprep.subr.bf16.mxu0 0
    %1872 = vmatpush1.bf16.msra.mxu0 0
    %1873 = vmatprep.mubr.bf16.mxu0 0
    %1874 = vmatmul.mubr.bf16.gmra.mrb[0].mxu0 %v1839
    %v1875 = vpop.f32.mrb[0].mxu0
    %v1876 = vadd.f32 0.0, %v1875
    %v1877 = vpop.f32.mrb[0].mxu0
    %v1878 = vpop.f32.mrb[0].mxu0
    %v1879 = vpop.f32.mrb[0].mxu0
    %1880 = vdwg.mxu0
    %v1882 = vsel %vm505, %v1555, 0
    %1884 = vmatprep.subr.bf16.mxu0 0
    %1885 = vmatpush1.bf16.msra.mxu0 %v1707
    %1886 = vmatprep.subr.bf16.mxu0 0
    %1887 = vmatpush1.bf16.msra.mxu0 0
    %1888 = vmatprep.subr.bf16.mxu0 0
    %1889 = vmatpush1.bf16.msra.mxu0 0
    %1890 = vmatprep.subr.bf16.mxu0 0
    %1891 = vmatpush1.bf16.msra.mxu0 0
    %1892 = vmatprep.subr.bf16.mxu0 0
    %1893 = vmatpush1.bf16.msra.mxu0 0
    %1894 = vmatprep.subr.bf16.mxu0 0
    %1895 = vmatpush1.bf16.msra.mxu0 0
    %1896 = vmatprep.subr.bf16.mxu0 0
    %1897 = vmatpush1.bf16.msra.mxu0 0
    %1898 = vmatprep.subr.bf16.mxu0 0
    %1899 = vmatpush1.bf16.msra.mxu0 0
    %1900 = vmatprep.subr.bf16.mxu0 0
    %1901 = vmatpush1.bf16.msra.mxu0 0
    %1902 = vmatprep.subr.bf16.mxu0 0
    %1903 = vmatpush1.bf16.msra.mxu0 0
    %1904 = vmatprep.subr.bf16.mxu0 0
    %1905 = vmatpush1.bf16.msra.mxu0 0
    %1906 = vmatprep.subr.bf16.mxu0 0
    %1907 = vmatpush1.bf16.msra.mxu0 0
    %1908 = vmatprep.subr.bf16.mxu0 0
    %1909 = vmatpush1.bf16.msra.mxu0 0
    %1910 = vmatprep.subr.bf16.mxu0 0
    %1911 = vmatpush1.bf16.msra.mxu0 0
    %1912 = vmatprep.subr.bf16.mxu0 0
    %1913 = vmatpush1.bf16.msra.mxu0 0
    %1914 = vmatprep.subr.bf16.mxu0 0
    %1915 = vmatpush1.bf16.msra.mxu0 0
    %1916 = vmatprep.mubr.bf16.mxu0 0
    %1917 = vmatmul.mubr.bf16.gmra.mrb[0].mxu0 %v1882
    %v1918 = vpop.f32.mrb[0].mxu0
    %v1919 = vadd.f32 0.0, %v1918
    %v1920 = vpop.f32.mrb[0].mxu0
    %v1921 = vpop.f32.mrb[0].mxu0
    %v1922 = vpop.f32.mrb[0].mxu0
    %1923 = vdwg.mxu0
    %v1924 = vsel %vm68, %v1600, 0.0
    %v1925 = vsel %vm68, %v1649, 0.0
    %v1926 = vadd.f32 %v1924, %v1925
    %v1927 = vsel %vm68, %v1698, 0.0
    %v1928 = vadd.f32 %v1926, %v1927
    %v1929 = vsel %vm68, %v1747, 0.0
    %v1930 = vadd.f32 %v1928, %v1929
    %v1931 = vsel %vm68, %v1790, 0.0
    %v1932 = vsel %vm68, %v1833, 0.0
    %v1933 = vadd.f32 %v1931, %v1932
    %v1934 = vsel %vm68, %v1876, 0.0
    %v1935 = vadd.f32 %v1933, %v1934
    %v1936 = vsel %vm68, %v1919, 0.0
    %v1937 = vadd.f32 %v1935, %v1936
    %1938 = vst.msk [vmem:[#allocation8] sm:$0xff] %vm68, %v1930
    %1939 = vst.msk [vmem:[#allocation8 + $0x8] sm:$0xff] %vm68, %v1937
    // Predicated region
    $region38: #{tpu_custom_call.1} parent=1 // pred_check
      _
    $region39: #{tpu_custom_call.1} parent=1 // pred_check_branch
      %1941 = sbr.rel (0) target = $region41
    $region40: #{tpu_custom_call.1} parent=1 // pred_region
      %s1943 = ssub.s32 256, 256
      %1944 = vsyncadd [#allocation4], %s1943
      %s1945 = sshll.u32 [#allocation8], 4
      %s1946 = int_to_ptr.vmem [resolvable:$true] %s1945
      %1951 = dma.vmem_to_hbm [thread:$0]  %s1946, 256, %s6, [#allocation4], 128, 128, 8
    $region41: #{tpu_custom_call.1} parent=1 // pred_fallthru
      _
    // Predicated region
    $region42: #{tpu_custom_call.1} parent=1 // pred_check
      _
    $region43: #{tpu_custom_call.1} parent=1 // pred_check_branch
      %1953 = sbr.rel (0) target = $region45
    $region44: #{tpu_custom_call.1} parent=1 // pred_region
      %1954 = dma.done [#allocation4], 256
    $region45: #{tpu_custom_call.1} parent=1 // pred_fallthru
      _
    %1955 = vsyncpa [#allocation3], 1
    %1956 = vsyncpa [#allocation6], 1
    %1957 = vsyncpa [#allocation4], 1

</llo_original>
